<compile_context>
chip_gen: v7x
topology: tpu7x:2x2x1
jax: 0.10.0
libtpu: 0.0.40
codegen_flags: <defaults>
</compile_context>

<pallas_src>
import math
import functools

import jax
import jax.numpy as jnp
from jax.experimental import pallas as pl
from jax.experimental.pallas import tpu as pltpu


# ---------------------------------------------------------------------------
# Tile / budget helpers
# ---------------------------------------------------------------------------

def _pick_tile(dim: int, target: int, align: int) -> int:
    """Largest tile <= target that divides `dim` and is a multiple of `align`.
    Falls back to the full dim (a full-extent block is always legal)."""
    if dim <= target:
        return dim
    t = (target // align) * align
    while t >= align:
        if dim % t == 0:
            return t
        t -= align
    return dim


def _largest_divisor_leq(n: int, cap: int) -> int:
    cap = max(1, min(n, cap))
    for d in range(cap, 0, -1):
        if n % d == 0:
            return d
    return 1


@functools.lru_cache(maxsize=1)
def _vmem_budget_bytes() -> int:
    """Generation-aware scoped-VMEM budget.

    v5e/v6e: 128 MiB VMEM per TensorCore -> allow ~96 MiB scoped.
    v7x:      64 MiB per TensorCore      -> stay at ~44 MiB (headroom for
    compiler-internal scratch).  Conservative fallback if the query fails."""
    cap = 64 * 1024 * 1024
    try:
        info = pltpu.get_tpu_info()
        cap = int(getattr(info, "vmem_capacity_bytes", cap))
    except Exception:
        pass
    if cap >= 100 * 1024 * 1024:
        return 96 * 1024 * 1024
    return 44 * 1024 * 1024


def _leaky(x, slope):
    return jnp.where(x >= 0.0, x, slope * x)


# ---------------------------------------------------------------------------
# Kernels
# ---------------------------------------------------------------------------

# ---- K == 1 fast path: no accumulator scratch, single fused pass ----------

def _plinear_k1_kernel(x_ref, w_ref, b_ref, o_ref, *, leaky_slope, activate):
    # x: (G, tm, tk), w: (G, tk, tn), b: (G, 1, tn), o: (G, tm, tn)
    acc = jnp.einsum("gbi,gio->gbo", x_ref[...], w_ref[...],
                     preferred_element_type=jnp.float32)
    acc = acc + b_ref[...].astype(jnp.float32)
    if activate:
        acc = _leaky(acc, leaky_slope)
    o_ref[...] = acc.astype(o_ref.dtype)


def _plinear_res_k1_kernel(x_ref, w_ref, b_ref, r_ref, o_ref, *, leaky_slope):
    acc = jnp.einsum("gbi,gio->gbo", x_ref[...], w_ref[...],
                     preferred_element_type=jnp.float32)
    acc = acc + b_ref[...].astype(jnp.float32) + r_ref[...].astype(jnp.float32)
    acc = _leaky(acc, leaky_slope)
    o_ref[...] = acc.astype(o_ref.dtype)


# ---- K > 1: f32 accumulator scratch, bias folded into the k==0 partial ----

def _plinear_kernel(x_ref, w_ref, b_ref, o_ref, acc_ref, *, leaky_slope, activate):
    k = pl.program_id(3)
    part = jnp.einsum("gbi,gio->gbo", x_ref[...], w_ref[...],
                      preferred_element_type=jnp.float32)

    @pl.when(k == 0)
    def _():
        acc_ref[...] = part + jnp.broadcast_to(
            b_ref[...].astype(jnp.float32), acc_ref.shape)

    @pl.when(k > 0)
    def _():
        acc_ref[...] += part

    @pl.when(k == pl.num_programs(3) - 1)
    def _():
        out = acc_ref[...]
        if activate:
            out = _leaky(out, leaky_slope)
        o_ref[...] = out.astype(o_ref.dtype)


def _plinear_res_kernel(x_ref, w_ref, b_ref, r_ref, o_ref, acc_ref, *, leaky_slope):
    k = pl.program_id(3)
    part = jnp.einsum("gbi,gio->gbo", x_ref[...], w_ref[...],
                      preferred_element_type=jnp.float32)

    @pl.when(k == 0)
    def _():
        acc_ref[...] = part + jnp.broadcast_to(
            b_ref[...].astype(jnp.float32), acc_ref.shape)

    @pl.when(k > 0)
    def _():
        acc_ref[...] += part

    @pl.when(k == pl.num_programs(3) - 1)
    def _():
        out = _leaky(acc_ref[...] + r_ref[...].astype(jnp.float32), leaky_slope)
        o_ref[...] = out.astype(o_ref.dtype)


# ---- Fully fused residual block: lrelu(lrelu(x@w1+b1)@w2 + b2 + x) --------

def _res_block_kernel(x_ref, w1_ref, b1_ref, w2_ref, b2_ref, o_ref, *, leaky_slope):
    x = x_ref[...]
    t = jnp.einsum("gbi,gio->gbo", x, w1_ref[...],
                   preferred_element_type=jnp.float32)
    t = _leaky(t + b1_ref[...].astype(jnp.float32), leaky_slope)
    out = jnp.einsum("gbi,gio->gbo", t.astype(w2_ref.dtype), w2_ref[...],
                     preferred_element_type=jnp.float32)
    out = out + b2_ref[...].astype(jnp.float32) + x.astype(jnp.float32)
    out = _leaky(out, leaky_slope)
    o_ref[...] = out.astype(o_ref.dtype)


# ---------------------------------------------------------------------------
# Wrapper: one pallas_call per ParallelLinearLayer (optionally fused act/res)
# ---------------------------------------------------------------------------

def parallel_linear(x, weight, bias, residual=None, *, activate=False,
                    leaky_slope=0.01, tile_m=512, tile_n=256, tile_k=512):
    """x: (M, B, Din), weight: (M, Din, Dout), bias: (M, 1, Dout) -> (M, B, Dout)."""
    M, B, Din = x.shape
    _, _, Dout = weight.shape
    itemsize = jnp.dtype(x.dtype).itemsize
    sub_align = 16 if itemsize == 2 else 8

    tm = _pick_tile(B, tile_m, sub_align)
    tn = _pick_tile(Dout, tile_n, 128)
    tk = _pick_tile(Din, tile_k, 128)

    n_b = B // tm
    n_n = Dout // tn
    n_k = Din // tk
    multi_k = n_k > 1
    has_res = residual is not None

    # Members per grid step: biggest divisor of M whose double-buffered footprint
    # fits half the scoped-VMEM budget (itemsize-accurate; f32 only for the acc).
    per_member = (2 * (tm * tk + tk * tn + tn) * itemsize   # x, w, bias (2x buffered)
                  + 2 * tm * tn * itemsize                   # output (2x buffered)
                  + (2 * tm * tn * itemsize if has_res else 0)
                  + tm * tn * 4)                             # f32 acc / live epilogue
    vmem_budget = _vmem_budget_bytes()
    step_budget = vmem_budget // 2
    G = _largest_divisor_leq(M, max(1, step_budget // per_member))

    # Megacore (v7x): guarantee at least one "parallel" grid axis of extent >= 2.
    if M >= 2 and (M // G) == 1 and n_b == 1 and n_n == 1:
        G = _largest_divisor_leq(M, M // 2)

    # Grid order: when K == 1, re-read only the smaller of the two operand streams.
    x_bytes = B * Din * itemsize
    w_bytes = Din * Dout * itemsize
    batch_outer = (not multi_k) and (n_b * w_bytes + x_bytes < n_n * x_bytes + w_bytes)

    if batch_outer:
        grid = (M // G, n_b, n_n, n_k)
        x_spec = pl.BlockSpec((G, tm, tk), lambda g, b, n, k: (g, b, k))
        w_spec = pl.BlockSpec((G, tk, tn), lambda g, b, n, k: (g, k, n))
        bias_spec = pl.BlockSpec((G, 1, tn), lambda g, b, n, k: (g, 0, n))
        out_spec = pl.BlockSpec((G, tm, tn), lambda g, b, n, k: (g, b, n))
        res_spec = pl.BlockSpec((G, tm, tn), lambda g, b, n, k: (g, b, n))
    else:
        grid = (M // G, n_n, n_b, n_k)
        x_spec = pl.BlockSpec((G, tm, tk), lambda g, n, b, k: (g, b, k))
        w_spec = pl.BlockSpec((G, tk, tn), lambda g, n, b, k: (g, k, n))
        bias_spec = pl.BlockSpec((G, 1, tn), lambda g, n, b, k: (g, 0, n))
        out_spec = pl.BlockSpec((G, tm, tn), lambda g, n, b, k: (g, b, n))
        res_spec = pl.BlockSpec((G, tm, tn), lambda g, n, b, k: (g, b, n))

    if multi_k:
        scratch = [pltpu.VMEM((G, tm, tn), jnp.float32)]
        if has_res:
            kernel = functools.partial(_plinear_res_kernel, leaky_slope=leaky_slope)
        else:
            kernel = functools.partial(_plinear_kernel, leaky_slope=leaky_slope,
                                       activate=activate)
    else:
        scratch = []
        if has_res:
            kernel = functools.partial(_plinear_res_k1_kernel, leaky_slope=leaky_slope)
        else:
            kernel = functools.partial(_plinear_k1_kernel, leaky_slope=leaky_slope,
                                       activate=activate)

    in_specs = [x_spec, w_spec, bias_spec] + ([res_spec] if has_res else [])
    operands = (x, weight, bias) + ((residual,) if has_res else ())

    # Cost hint (accounts for the redundant re-read stream of the chosen order).
    x_reads = 1 if (batch_outer and not multi_k) else n_n
    w_reads = 1 if ((not batch_outer) and not multi_k) else n_b
    flops = 2 * M * B * Din * Dout
    bytes_accessed = int(itemsize * (x.size * x_reads + weight.size * w_reads
                                     + bias.size + M * B * Dout)
                         + (residual.size * itemsize if has_res else 0))
    cost = pl.CostEstimate(flops=flops, transcendentals=0,
                           bytes_accessed=bytes_accessed)

    return pl.pallas_call(
        kernel,
        out_shape=jax.ShapeDtypeStruct((M, B, Dout), x.dtype),
        grid=grid,
        in_specs=in_specs,
        out_specs=out_spec,
        scratch_shapes=scratch,
        compiler_params=pltpu.CompilerParams(
            dimension_semantics=("parallel", "parallel", "parallel", "arbitrary"),
            vmem_limit_bytes=int(vmem_budget),
        ),
        cost_estimate=cost,
    )(*operands)


# ---------------------------------------------------------------------------
# Wrapper: fully fused ParallelResidualBlockLayer (single pallas_call)
# ---------------------------------------------------------------------------

def parallel_res_block(x, w1, b1, w2, b2, *, leaky_slope=0.01, tile_m=512):
    """Fused leaky_relu(leaky_relu(x @ w1 + b1) @ w2 + b2 + x).
    Returns None when the fused working set does not fit the VMEM budget;
    the caller then falls back to two parallel_linear calls."""
    M, B, H = x.shape
    itemsize = jnp.dtype(x.dtype).itemsize
    sub_align = 16 if itemsize == 2 else 8
    tm = _pick_tile(B, tile_m, sub_align)
    n_b = B // tm

    per_member = (2 * 2 * tm * H * itemsize             # x + out, double-buffered
                  + 2 * (2 * H * H + 2 * H) * itemsize   # w1, w2, b1, b2 (2x buffered)
                  + 3 * tm * H * 4)                      # live f32 intermediates
    vmem_budget = _vmem_budget_bytes()
    step_budget = vmem_budget // 2
    if per_member > step_budget:
        return None

    G = _largest_divisor_leq(M, max(1, step_budget // per_member))
    if M >= 2 and (M // G) == 1 and n_b == 1:
        G = _largest_divisor_leq(M, M // 2)   # megacore: keep both v7x TCs busy

    grid = (M // G, n_b)
    x_spec = pl.BlockSpec((G, tm, H), lambda g, b: (g, b, 0))
    w_spec = pl.BlockSpec((G, H, H), lambda g, b: (g, 0, 0))
    bias_spec = pl.BlockSpec((G, 1, H), lambda g, b: (g, 0, 0))
    out_spec = pl.BlockSpec((G, tm, H), lambda g, b: (g, b, 0))

    flops = 2 * 2 * M * B * H * H
    bytes_accessed = int(itemsize * (2 * x.size + w1.size + w2.size
                                     + b1.size + b2.size))
    cost = pl.CostEstimate(flops=flops, transcendentals=0,
                           bytes_accessed=bytes_accessed)

    return pl.pallas_call(
        functools.partial(_res_block_kernel, leaky_slope=leaky_slope),
        out_shape=jax.ShapeDtypeStruct((M, B, H), x.dtype),
        grid=grid,
        in_specs=[x_spec, w_spec, bias_spec, w_spec, bias_spec],
        out_specs=out_spec,
        compiler_params=pltpu.CompilerParams(
            dimension_semantics=("parallel", "parallel"),
            vmem_limit_bytes=int(vmem_budget),
        ),
        cost_estimate=cost,
    )(x, w1, b1, w2, b2)


# ---------------------------------------------------------------------------
# Full ParallelResMLPs forward (inference path: dropout=0, use_batch_norm=False)
# ---------------------------------------------------------------------------
# TODO(synk): BatchNorm1d (use_batch_norm=True) and training-mode Dropout are not
#             implemented; module defaults (use_batch_norm=False, dropout=0.0) are
#             identity so the default configuration matches exactly.
# TODO(synk): when output_size < 128 the final layer's stores are lane-masked; a
#             lane-dense repack (folding M*Dout into the last dim) would need an
#             extra XLA transpose, so it is intentionally left out here.

@functools.partial(jax.jit, static_argnames=("leaky_slope",))
def parallel_res_mlps_forward(x, params, leaky_slope=0.01):
    w_in, b_in = params["input"]
    h = parallel_linear(x, w_in, b_in, activate=True, leaky_slope=leaky_slope)
    for (w1, b1), (w2, b2) in params["blocks"]:
        fused = parallel_res_block(h, w1, b1, w2, b2, leaky_slope=leaky_slope)
        if fused is not None:
            h = fused
        else:
            t = parallel_linear(h, w1, b1, activate=True, leaky_slope=leaky_slope)
            h = parallel_linear(t, w2, b2, residual=h, leaky_slope=leaky_slope)
    w_out, b_out = params["output"]
    return parallel_linear(h, w_out, b_out, activate=False, leaky_slope=leaky_slope)


# ---------------------------------------------------------------------------
# Parameter init mirroring the PyTorch module (uniform(-stdv, stdv), stdv=1/sqrt(d_in))
# ---------------------------------------------------------------------------

def _init_parallel_linear(key, n_models, d_in, d_out, dtype=jnp.float32):
    stdv = 1.0 / math.sqrt(d_in)
    kw, kb = jax.random.split(key)
    w = jax.random.uniform(kw, (n_models, d_in, d_out), dtype=dtype,
                           minval=-stdv, maxval=stdv)
    b = jax.random.uniform(kb, (n_models, 1, d_out), dtype=dtype,
                           minval=-stdv, maxval=stdv)
    return w, b


def init_parallel_res_mlps(key, n_models, input_size, hidden_size, n_res_block,
                           output_size, dtype=jnp.float32):
    keys = jax.random.split(key, 2 + 2 * n_res_block)
    params = {
        "input": _init_parallel_linear(keys[0], n_models, input_size, hidden_size, dtype),
        "blocks": [],
        "output": _init_parallel_linear(keys[1], n_models, hidden_size, output_size, dtype),
    }
    for i in range(n_res_block):
        l1 = _init_parallel_linear(keys[2 + 2 * i], n_models, hidden_size, hidden_size, dtype)
        l2 = _init_parallel_linear(keys[3 + 2 * i], n_models, hidden_size, hidden_size, dtype)
        params["blocks"].append((l1, l2))
    return params


# ---------------------------------------------------------------------------
# Pure-JAX reference (same semantics as the PyTorch forward)
# ---------------------------------------------------------------------------

def _reference_forward(x, params, leaky_slope):
    def lin(h, wb):
        w, b = wb
        return jnp.einsum("mbi,mio->mbo", h, w) + b

    def lrelu(h):
        return jnp.where(h >= 0, h, leaky_slope * h)

    h = lrelu(lin(x, params["input"]))
    for l1, l2 in params["blocks"]:
        t = lrelu(lin(h, l1))
        h = lrelu(lin(t, l2) + h)
    return lin(h, params["output"])


if __name__ == "__main__":
    key = jax.random.PRNGKey(0)
    kx, kp, ke = jax.random.split(key, 3)

    n_models, batch = 4, 8
    input_size, hidden_size, output_size, n_res_block = 32, 32, 16, 2

    x = jax.random.normal(kx, (n_models, batch, input_size), dtype=jnp.float32)
    params = init_parallel_res_mlps(kp, n_models, input_size, hidden_size,
                                    n_res_block, output_size)

    out = parallel_res_mlps_forward(x, params, leaky_slope=0.01)
    out = jax.block_until_ready(out)

    ref = _reference_forward(x, params, 0.01)
    assert out.shape == (n_models, batch, output_size)
    assert jnp.allclose(out, ref, atol=1e-4, rtol=1e-4), \
        float(jnp.max(jnp.abs(out - ref)))

    # Also exercise the multi-K-step reduction kernels (K = 2) and residual fusion.
    M2, B2, D2, O2 = 2, 16, 256, 128
    k1, k2, k3, k4 = jax.random.split(ke, 4)
    x2 = jax.random.normal(k1, (M2, B2, D2), jnp.float32)
    wt = 0.05 * jax.random.normal(k2, (M2, D2, O2), jnp.float32)
    bt = jax.random.normal(k3, (M2, 1, O2), jnp.float32)
    rt = jax.random.normal(k4, (M2, B2, O2), jnp.float32)

    def _lrelu(v):
        return jnp.where(v >= 0, v, 0.01 * v)

    y_act = jax.block_until_ready(
        parallel_linear(x2, wt, bt, activate=True, tile_k=128))
    y_act_ref = _lrelu(jnp.einsum("mbi,mio->mbo", x2, wt) + bt)
    assert jnp.allclose(y_act, y_act_ref, atol=2e-2, rtol=2e-2), \
        float(jnp.max(jnp.abs(y_act - y_act_ref)))

    y_res = jax.block_until_ready(
        parallel_linear(x2, wt, bt, residual=rt, tile_k=128))
    y_res_ref = _lrelu(jnp.einsum("mbi,mio->mbo", x2, wt) + bt + rt)
    assert jnp.allclose(y_res, y_res_ref, atol=2e-2, rtol=2e-2), \
        float(jnp.max(jnp.abs(y_res - y_res_ref)))

    print("KERNEL_OK")
</pallas_src>

<mosaic_0001>
module attributes {stable_mosaic.version = 11 : i64} {
  func.func @_plinear_k1_kernel(%arg0: i32, %arg1: i32, %arg2: i32, %arg3: i32, %arg4: memref<2x8x32xf32, #tpu.memory_space<vmem>>, %arg5: memref<2x32x32xf32, #tpu.memory_space<vmem>>, %arg6: memref<2x1x32xf32, #tpu.memory_space<vmem>>, %arg7: memref<2x8x32xf32, #tpu.memory_space<vmem>>) attributes {dimension_semantics = [#tpu.dimension_semantics<parallel>, #tpu.dimension_semantics<parallel>, #tpu.dimension_semantics<parallel>, #tpu.dimension_semantics<arbitrary>], iteration_bounds = array<i64: 2, 1, 1, 1>, scalar_prefetch = 0 : i64, scratch_operands = 0 : i64, tpu.core_type = #tpu.core_type<tc>, window_params = [{transform_indices = @transform_0, window_bounds = array<i64: 2, 8, 32>}, {transform_indices = @transform_1, window_bounds = array<i64: 2, 32, 32>}, {transform_indices = @transform_2, window_bounds = array<i64: 2, 1, 32>}, {transform_indices = @transform_3, window_bounds = array<i64: 2, 8, 32>}]} {
    %c0 = arith.constant 0 : index
    %c0_0 = arith.constant 0 : index
    %c0_1 = arith.constant 0 : index
    %0 = vector.load %arg4[%c0, %c0_0, %c0_1] : memref<2x8x32xf32, #tpu.memory_space<vmem>>, vector<2x8x32xf32>
    %c0_2 = arith.constant 0 : index
    %c0_3 = arith.constant 0 : index
    %c0_4 = arith.constant 0 : index
    %1 = vector.load %arg5[%c0_2, %c0_3, %c0_4] : memref<2x32x32xf32, #tpu.memory_space<vmem>>, vector<2x32x32xf32>
    "tpu.trace_start"() <{level = 10 : i32, message = "gbi,gio->gbo"}> : () -> ()
    %cst = arith.constant dense<0.000000e+00> : vector<2x8x32xf32>
    %2 = tpu.matmul %0, %1, %cst {dimension_numbers = #tpu.dot_dimension_numbers<[2], [1], [1], [2], [0, 0, 0, 1, 1, 2], [0], [0]>} : vector<2x8x32xf32>, vector<2x32x32xf32>, vector<2x8x32xf32> -> vector<2x8x32xf32>
    "tpu.trace_stop"() : () -> ()
    %c0_5 = arith.constant 0 : index
    %c0_6 = arith.constant 0 : index
    %c0_7 = arith.constant 0 : index
    %3 = vector.load %arg6[%c0_5, %c0_6, %c0_7] : memref<2x1x32xf32, #tpu.memory_space<vmem>>, vector<2x1x32xf32>
    %4 = vector.broadcast %3 : vector<2x1x32xf32> to vector<2x8x32xf32>
    %5 = arith.addf %2, %4 : vector<2x8x32xf32>
    %cst_8 = arith.constant 0.000000e+00 : f32
    %6 = vector.broadcast %cst_8 : f32 to vector<2x8x32xf32>
    %7 = arith.cmpf oge, %5, %6 : vector<2x8x32xf32>
    %cst_9 = arith.constant 0.00999999977 : f32
    %8 = vector.broadcast %cst_9 : f32 to vector<2x8x32xf32>
    %9 = arith.mulf %8, %5 : vector<2x8x32xf32>
    %10 = arith.select %7, %5, %9 : vector<2x8x32xi1>, vector<2x8x32xf32>
    %c0_10 = arith.constant 0 : index
    %c0_11 = arith.constant 0 : index
    %c0_12 = arith.constant 0 : index
    %11 = vector.load %arg7[%c0_10, %c0_11, %c0_12] : memref<2x8x32xf32, #tpu.memory_space<vmem>>, vector<2x8x32xf32>
    tpu.vector_store %arg7[%c0_10, %c0_11, %c0_12], %10 {strides = array<i32>} : memref<2x8x32xf32, #tpu.memory_space<vmem>>, vector<2x8x32xf32>,
    return
  }
  func.func @transform_0(%arg0: i32, %arg1: i32, %arg2: i32, %arg3: i32) -> (i32, i32, i32) {
    %c0_i32 = arith.constant 0 : i32
    return %arg0, %arg2, %arg3 : i32, i32, i32
  }
  func.func @transform_1(%arg0: i32, %arg1: i32, %arg2: i32, %arg3: i32) -> (i32, i32, i32) {
    %c0_i32 = arith.constant 0 : i32
    return %arg0, %arg3, %arg1 : i32, i32, i32
  }
  func.func @transform_2(%arg0: i32, %arg1: i32, %arg2: i32, %arg3: i32) -> (i32, i32, i32) {
    %c0_i32 = arith.constant 0 : i32
    %c0_i32_0 = arith.constant 0 : i32
    return %arg0, %c0_i32, %arg1 : i32, i32, i32
  }
  func.func @transform_3(%arg0: i32, %arg1: i32, %arg2: i32, %arg3: i32) -> (i32, i32, i32) {
    %c0_i32 = arith.constant 0 : i32
    return %arg0, %arg2, %arg1 : i32, i32, i32
  }
}

module attributes {stable_mosaic.version = 11 : i64} {
  func.func @_res_block_kernel(%arg0: i32, %arg1: i32, %arg2: memref<2x8x32xf32, #tpu.memory_space<vmem>>, %arg3: memref<2x32x32xf32, #tpu.memory_space<vmem>>, %arg4: memref<2x1x32xf32, #tpu.memory_space<vmem>>, %arg5: memref<2x32x32xf32, #tpu.memory_space<vmem>>, %arg6: memref<2x1x32xf32, #tpu.memory_space<vmem>>, %arg7: memref<2x8x32xf32, #tpu.memory_space<vmem>>) attributes {dimension_semantics = [#tpu.dimension_semantics<parallel>, #tpu.dimension_semantics<parallel>], iteration_bounds = array<i64: 2, 1>, scalar_prefetch = 0 : i64, scratch_operands = 0 : i64, tpu.core_type = #tpu.core_type<tc>, window_params = [{transform_indices = @transform_0, window_bounds = array<i64: 2, 8, 32>}, {transform_indices = @transform_1, window_bounds = array<i64: 2, 32, 32>}, {transform_indices = @transform_2, window_bounds = array<i64: 2, 1, 32>}, {transform_indices = @transform_3, window_bounds = array<i64: 2, 32, 32>}, {transform_indices = @transform_4, window_bounds = array<i64: 2, 1, 32>}, {transform_indices = @transform_5, window_bounds = array<i64: 2, 8, 32>}]} {
    %c0 = arith.constant 0 : index
    %c0_0 = arith.constant 0 : index
    %c0_1 = arith.constant 0 : index
    %0 = vector.load %arg2[%c0, %c0_0, %c0_1] : memref<2x8x32xf32, #tpu.memory_space<vmem>>, vector<2x8x32xf32>
    %c0_2 = arith.constant 0 : index
    %c0_3 = arith.constant 0 : index
    %c0_4 = arith.constant 0 : index
    %1 = vector.load %arg3[%c0_2, %c0_3, %c0_4] : memref<2x32x32xf32, #tpu.memory_space<vmem>>, vector<2x32x32xf32>
    "tpu.trace_start"() <{level = 10 : i32, message = "gbi,gio->gbo"}> : () -> ()
    %cst = arith.constant dense<0.000000e+00> : vector<2x8x32xf32>
    %2 = tpu.matmul %0, %1, %cst {dimension_numbers = #tpu.dot_dimension_numbers<[2], [1], [1], [2], [0, 0, 0, 1, 1, 2], [0], [0]>} : vector<2x8x32xf32>, vector<2x32x32xf32>, vector<2x8x32xf32> -> vector<2x8x32xf32>
    "tpu.trace_stop"() : () -> ()
    %c0_5 = arith.constant 0 : index
    %c0_6 = arith.constant 0 : index
    %c0_7 = arith.constant 0 : index
    %3 = vector.load %arg4[%c0_5, %c0_6, %c0_7] : memref<2x1x32xf32, #tpu.memory_space<vmem>>, vector<2x1x32xf32>
    %4 = vector.broadcast %3 : vector<2x1x32xf32> to vector<2x8x32xf32>
    %5 = arith.addf %2, %4 : vector<2x8x32xf32>
    %cst_8 = arith.constant 0.000000e+00 : f32
    %6 = vector.broadcast %cst_8 : f32 to vector<2x8x32xf32>
    %7 = arith.cmpf oge, %5, %6 : vector<2x8x32xf32>
    %cst_9 = arith.constant 0.00999999977 : f32
    %8 = vector.broadcast %cst_9 : f32 to vector<2x8x32xf32>
    %9 = arith.mulf %8, %5 : vector<2x8x32xf32>
    %10 = arith.select %7, %5, %9 : vector<2x8x32xi1>, vector<2x8x32xf32>
    %c0_10 = arith.constant 0 : index
    %c0_11 = arith.constant 0 : index
    %c0_12 = arith.constant 0 : index
    %11 = vector.load %arg5[%c0_10, %c0_11, %c0_12] : memref<2x32x32xf32, #tpu.memory_space<vmem>>, vector<2x32x32xf32>
    "tpu.trace_start"() <{level = 10 : i32, message = "gbi,gio->gbo"}> : () -> ()
    %cst_13 = arith.constant dense<0.000000e+00> : vector<2x8x32xf32>
    %12 = tpu.matmul %10, %11, %cst_13 {dimension_numbers = #tpu.dot_dimension_numbers<[2], [1], [1], [2], [0, 0, 0, 1, 1, 2], [0], [0]>} : vector<2x8x32xf32>, vector<2x32x32xf32>, vector<2x8x32xf32> -> vector<2x8x32xf32>
    "tpu.trace_stop"() : () -> ()
    %c0_14 = arith.constant 0 : index
    %c0_15 = arith.constant 0 : index
    %c0_16 = arith.constant 0 : index
    %13 = vector.load %arg6[%c0_14, %c0_15, %c0_16] : memref<2x1x32xf32, #tpu.memory_space<vmem>>, vector<2x1x32xf32>
    %14 = vector.broadcast %13 : vector<2x1x32xf32> to vector<2x8x32xf32>
    %15 = arith.addf %12, %14 : vector<2x8x32xf32>
    %16 = arith.addf %15, %0 : vector<2x8x32xf32>
    %cst_17 = arith.constant 0.000000e+00 : f32
    %17 = vector.broadcast %cst_17 : f32 to vector<2x8x32xf32>
    %18 = arith.cmpf oge, %16, %17 : vector<2x8x32xf32>
    %cst_18 = arith.constant 0.00999999977 : f32
    %19 = vector.broadcast %cst_18 : f32 to vector<2x8x32xf32>
    %20 = arith.mulf %19, %16 : vector<2x8x32xf32>
    %21 = arith.select %18, %16, %20 : vector<2x8x32xi1>, vector<2x8x32xf32>
    %c0_19 = arith.constant 0 : index
    %c0_20 = arith.constant 0 : index
    %c0_21 = arith.constant 0 : index
    %22 = vector.load %arg7[%c0_19, %c0_20, %c0_21] : memref<2x8x32xf32, #tpu.memory_space<vmem>>, vector<2x8x32xf32>
    tpu.vector_store %arg7[%c0_19, %c0_20, %c0_21], %21 {strides = array<i32>} : memref<2x8x32xf32, #tpu.memory_space<vmem>>, vector<2x8x32xf32>,
    return
  }
  func.func @transform_0(%arg0: i32, %arg1: i32) -> (i32, i32, i32) {
    %c0_i32 = arith.constant 0 : i32
    %c0_i32_0 = arith.constant 0 : i32
    return %arg0, %arg1, %c0_i32 : i32, i32, i32
  }
  func.func @transform_1(%arg0: i32, %arg1: i32) -> (i32, i32, i32) {
    %c0_i32 = arith.constant 0 : i32
    %c0_i32_0 = arith.constant 0 : i32
    %c0_i32_1 = arith.constant 0 : i32
    return %arg0, %c0_i32, %c0_i32_0 : i32, i32, i32
  }
  func.func @transform_2(%arg0: i32, %arg1: i32) -> (i32, i32, i32) {
    %c0_i32 = arith.constant 0 : i32
    %c0_i32_0 = arith.constant 0 : i32
    %c0_i32_1 = arith.constant 0 : i32
    return %arg0, %c0_i32, %c0_i32_0 : i32, i32, i32
  }
  func.func @transform_3(%arg0: i32, %arg1: i32) -> (i32, i32, i32) {
    %c0_i32 = arith.constant 0 : i32
    %c0_i32_0 = arith.constant 0 : i32
    %c0_i32_1 = arith.constant 0 : i32
    return %arg0, %c0_i32, %c0_i32_0 : i32, i32, i32
  }
  func.func @transform_4(%arg0: i32, %arg1: i32) -> (i32, i32, i32) {
    %c0_i32 = arith.constant 0 : i32
    %c0_i32_0 = arith.constant 0 : i32
    %c0_i32_1 = arith.constant 0 : i32
    return %arg0, %c0_i32, %c0_i32_0 : i32, i32, i32
  }
  func.func @transform_5(%arg0: i32, %arg1: i32) -> (i32, i32, i32) {
    %c0_i32 = arith.constant 0 : i32
    %c0_i32_0 = arith.constant 0 : i32
    return %arg0, %arg1, %c0_i32 : i32, i32, i32
  }
}

module attributes {stable_mosaic.version = 11 : i64} {
  func.func @_res_block_kernel(%arg0: i32, %arg1: i32, %arg2: memref<2x8x32xf32, #tpu.memory_space<vmem>>, %arg3: memref<2x32x32xf32, #tpu.memory_space<vmem>>, %arg4: memref<2x1x32xf32, #tpu.memory_space<vmem>>, %arg5: memref<2x32x32xf32, #tpu.memory_space<vmem>>, %arg6: memref<2x1x32xf32, #tpu.memory_space<vmem>>, %arg7: memref<2x8x32xf32, #tpu.memory_space<vmem>>) attributes {dimension_semantics = [#tpu.dimension_semantics<parallel>, #tpu.dimension_semantics<parallel>], iteration_bounds = array<i64: 2, 1>, scalar_prefetch = 0 : i64, scratch_operands = 0 : i64, tpu.core_type = #tpu.core_type<tc>, window_params = [{transform_indices = @transform_0, window_bounds = array<i64: 2, 8, 32>}, {transform_indices = @transform_1, window_bounds = array<i64: 2, 32, 32>}, {transform_indices = @transform_2, window_bounds = array<i64: 2, 1, 32>}, {transform_indices = @transform_3, window_bounds = array<i64: 2, 32, 32>}, {transform_indices = @transform_4, window_bounds = array<i64: 2, 1, 32>}, {transform_indices = @transform_5, window_bounds = array<i64: 2, 8, 32>}]} {
    %c0 = arith.constant 0 : index
    %c0_0 = arith.constant 0 : index
    %c0_1 = arith.constant 0 : index
    %0 = vector.load %arg2[%c0, %c0_0, %c0_1] : memref<2x8x32xf32, #tpu.memory_space<vmem>>, vector<2x8x32xf32>
    %c0_2 = arith.constant 0 : index
    %c0_3 = arith.constant 0 : index
    %c0_4 = arith.constant 0 : index
    %1 = vector.load %arg3[%c0_2, %c0_3, %c0_4] : memref<2x32x32xf32, #tpu.memory_space<vmem>>, vector<2x32x32xf32>
    "tpu.trace_start"() <{level = 10 : i32, message = "gbi,gio->gbo"}> : () -> ()
    %cst = arith.constant dense<0.000000e+00> : vector<2x8x32xf32>
    %2 = tpu.matmul %0, %1, %cst {dimension_numbers = #tpu.dot_dimension_numbers<[2], [1], [1], [2], [0, 0, 0, 1, 1, 2], [0], [0]>} : vector<2x8x32xf32>, vector<2x32x32xf32>, vector<2x8x32xf32> -> vector<2x8x32xf32>
    "tpu.trace_stop"() : () -> ()
    %c0_5 = arith.constant 0 : index
    %c0_6 = arith.constant 0 : index
    %c0_7 = arith.constant 0 : index
    %3 = vector.load %arg4[%c0_5, %c0_6, %c0_7] : memref<2x1x32xf32, #tpu.memory_space<vmem>>, vector<2x1x32xf32>
    %4 = vector.broadcast %3 : vector<2x1x32xf32> to vector<2x8x32xf32>
    %5 = arith.addf %2, %4 : vector<2x8x32xf32>
    %cst_8 = arith.constant 0.000000e+00 : f32
    %6 = vector.broadcast %cst_8 : f32 to vector<2x8x32xf32>
    %7 = arith.cmpf oge, %5, %6 : vector<2x8x32xf32>
    %cst_9 = arith.constant 0.00999999977 : f32
    %8 = vector.broadcast %cst_9 : f32 to vector<2x8x32xf32>
    %9 = arith.mulf %8, %5 : vector<2x8x32xf32>
    %10 = arith.select %7, %5, %9 : vector<2x8x32xi1>, vector<2x8x32xf32>
    %c0_10 = arith.constant 0 : index
    %c0_11 = arith.constant 0 : index
    %c0_12 = arith.constant 0 : index
    %11 = vector.load %arg5[%c0_10, %c0_11, %c0_12] : memref<2x32x32xf32, #tpu.memory_space<vmem>>, vector<2x32x32xf32>
    "tpu.trace_start"() <{level = 10 : i32, message = "gbi,gio->gbo"}> : () -> ()
    %cst_13 = arith.constant dense<0.000000e+00> : vector<2x8x32xf32>
    %12 = tpu.matmul %10, %11, %cst_13 {dimension_numbers = #tpu.dot_dimension_numbers<[2], [1], [1], [2], [0, 0, 0, 1, 1, 2], [0], [0]>} : vector<2x8x32xf32>, vector<2x32x32xf32>, vector<2x8x32xf32> -> vector<2x8x32xf32>
    "tpu.trace_stop"() : () -> ()
    %c0_14 = arith.constant 0 : index
    %c0_15 = arith.constant 0 : index
    %c0_16 = arith.constant 0 : index
    %13 = vector.load %arg6[%c0_14, %c0_15, %c0_16] : memref<2x1x32xf32, #tpu.memory_space<vmem>>, vector<2x1x32xf32>
    %14 = vector.broadcast %13 : vector<2x1x32xf32> to vector<2x8x32xf32>
    %15 = arith.addf %12, %14 : vector<2x8x32xf32>
    %16 = arith.addf %15, %0 : vector<2x8x32xf32>
    %cst_17 = arith.constant 0.000000e+00 : f32
    %17 = vector.broadcast %cst_17 : f32 to vector<2x8x32xf32>
    %18 = arith.cmpf oge, %16, %17 : vector<2x8x32xf32>
    %cst_18 = arith.constant 0.00999999977 : f32
    %19 = vector.broadcast %cst_18 : f32 to vector<2x8x32xf32>
    %20 = arith.mulf %19, %16 : vector<2x8x32xf32>
    %21 = arith.select %18, %16, %20 : vector<2x8x32xi1>, vector<2x8x32xf32>
    %c0_19 = arith.constant 0 : index
    %c0_20 = arith.constant 0 : index
    %c0_21 = arith.constant 0 : index
    %22 = vector.load %arg7[%c0_19, %c0_20, %c0_21] : memref<2x8x32xf32, #tpu.memory_space<vmem>>, vector<2x8x32xf32>
    tpu.vector_store %arg7[%c0_19, %c0_20, %c0_21], %21 {strides = array<i32>} : memref<2x8x32xf32, #tpu.memory_space<vmem>>, vector<2x8x32xf32>,
    return
  }
  func.func @transform_0(%arg0: i32, %arg1: i32) -> (i32, i32, i32) {
    %c0_i32 = arith.constant 0 : i32
    %c0_i32_0 = arith.constant 0 : i32
    return %arg0, %arg1, %c0_i32 : i32, i32, i32
  }
  func.func @transform_1(%arg0: i32, %arg1: i32) -> (i32, i32, i32) {
    %c0_i32 = arith.constant 0 : i32
    %c0_i32_0 = arith.constant 0 : i32
    %c0_i32_1 = arith.constant 0 : i32
    return %arg0, %c0_i32, %c0_i32_0 : i32, i32, i32
  }
  func.func @transform_2(%arg0: i32, %arg1: i32) -> (i32, i32, i32) {
    %c0_i32 = arith.constant 0 : i32
    %c0_i32_0 = arith.constant 0 : i32
    %c0_i32_1 = arith.constant 0 : i32
    return %arg0, %c0_i32, %c0_i32_0 : i32, i32, i32
  }
  func.func @transform_3(%arg0: i32, %arg1: i32) -> (i32, i32, i32) {
    %c0_i32 = arith.constant 0 : i32
    %c0_i32_0 = arith.constant 0 : i32
    %c0_i32_1 = arith.constant 0 : i32
    return %arg0, %c0_i32, %c0_i32_0 : i32, i32, i32
  }
  func.func @transform_4(%arg0: i32, %arg1: i32) -> (i32, i32, i32) {
    %c0_i32 = arith.constant 0 : i32
    %c0_i32_0 = arith.constant 0 : i32
    %c0_i32_1 = arith.constant 0 : i32
    return %arg0, %c0_i32, %c0_i32_0 : i32, i32, i32
  }
  func.func @transform_5(%arg0: i32, %arg1: i32) -> (i32, i32, i32) {
    %c0_i32 = arith.constant 0 : i32
    %c0_i32_0 = arith.constant 0 : i32
    return %arg0, %arg1, %c0_i32 : i32, i32, i32
  }
}

module attributes {stable_mosaic.version = 11 : i64} {
  func.func @_plinear_k1_kernel(%arg0: i32, %arg1: i32, %arg2: i32, %arg3: i32, %arg4: memref<2x8x32xf32, #tpu.memory_space<vmem>>, %arg5: memref<2x32x16xf32, #tpu.memory_space<vmem>>, %arg6: memref<2x1x16xf32, #tpu.memory_space<vmem>>, %arg7: memref<2x8x16xf32, #tpu.memory_space<vmem>>) attributes {dimension_semantics = [#tpu.dimension_semantics<parallel>, #tpu.dimension_semantics<parallel>, #tpu.dimension_semantics<parallel>, #tpu.dimension_semantics<arbitrary>], iteration_bounds = array<i64: 2, 1, 1, 1>, scalar_prefetch = 0 : i64, scratch_operands = 0 : i64, tpu.core_type = #tpu.core_type<tc>, window_params = [{transform_indices = @transform_0, window_bounds = array<i64: 2, 8, 32>}, {transform_indices = @transform_1, window_bounds = array<i64: 2, 32, 16>}, {transform_indices = @transform_2, window_bounds = array<i64: 2, 1, 16>}, {transform_indices = @transform_3, window_bounds = array<i64: 2, 8, 16>}]} {
    %c0 = arith.constant 0 : index
    %c0_0 = arith.constant 0 : index
    %c0_1 = arith.constant 0 : index
    %0 = vector.load %arg4[%c0, %c0_0, %c0_1] : memref<2x8x32xf32, #tpu.memory_space<vmem>>, vector<2x8x32xf32>
    %c0_2 = arith.constant 0 : index
    %c0_3 = arith.constant 0 : index
    %c0_4 = arith.constant 0 : index
    %1 = vector.load %arg5[%c0_2, %c0_3, %c0_4] : memref<2x32x16xf32, #tpu.memory_space<vmem>>, vector<2x32x16xf32>
    "tpu.trace_start"() <{level = 10 : i32, message = "gbi,gio->gbo"}> : () -> ()
    %cst = arith.constant dense<0.000000e+00> : vector<2x8x16xf32>
    %2 = tpu.matmul %0, %1, %cst {dimension_numbers = #tpu.dot_dimension_numbers<[2], [1], [1], [2], [0, 0, 0, 1, 1, 2], [0], [0]>} : vector<2x8x32xf32>, vector<2x32x16xf32>, vector<2x8x16xf32> -> vector<2x8x16xf32>
    "tpu.trace_stop"() : () -> ()
    %c0_5 = arith.constant 0 : index
    %c0_6 = arith.constant 0 : index
    %c0_7 = arith.constant 0 : index
    %3 = vector.load %arg6[%c0_5, %c0_6, %c0_7] : memref<2x1x16xf32, #tpu.memory_space<vmem>>, vector<2x1x16xf32>
    %4 = vector.broadcast %3 : vector<2x1x16xf32> to vector<2x8x16xf32>
    %5 = arith.addf %2, %4 : vector<2x8x16xf32>
    %c0_8 = arith.constant 0 : index
    %c0_9 = arith.constant 0 : index
    %c0_10 = arith.constant 0 : index
    %6 = vector.load %arg7[%c0_8, %c0_9, %c0_10] : memref<2x8x16xf32, #tpu.memory_space<vmem>>, vector<2x8x16xf32>
    tpu.vector_store %arg7[%c0_8, %c0_9, %c0_10], %5 {strides = array<i32>} : memref<2x8x16xf32, #tpu.memory_space<vmem>>, vector<2x8x16xf32>,
    return
  }
  func.func @transform_0(%arg0: i32, %arg1: i32, %arg2: i32, %arg3: i32) -> (i32, i32, i32) {
    %c0_i32 = arith.constant 0 : i32
    return %arg0, %arg2, %arg3 : i32, i32, i32
  }
  func.func @transform_1(%arg0: i32, %arg1: i32, %arg2: i32, %arg3: i32) -> (i32, i32, i32) {
    %c0_i32 = arith.constant 0 : i32
    return %arg0, %arg3, %arg1 : i32, i32, i32
  }
  func.func @transform_2(%arg0: i32, %arg1: i32, %arg2: i32, %arg3: i32) -> (i32, i32, i32) {
    %c0_i32 = arith.constant 0 : i32
    %c0_i32_0 = arith.constant 0 : i32
    return %arg0, %c0_i32, %arg1 : i32, i32, i32
  }
  func.func @transform_3(%arg0: i32, %arg1: i32, %arg2: i32, %arg3: i32) -> (i32, i32, i32) {
    %c0_i32 = arith.constant 0 : i32
    return %arg0, %arg2, %arg1 : i32, i32, i32
  }
}

</mosaic_0001>

<llo_original>
// kernel: parallel_res_mlps_forward.4
$region0: #{parallel_res_mlps_forward.4}
  #allocation0 [shape = 'u32[]', space=smem, size = 0x4, offset = 0x4, fixed_abs, tag = 'smem constant byte address 0x4 - core index']
  #allocation1 [shape = 'u32[144,128]{1,0:T(1,128)}', space=vmem, size = 0x12000, scoped, tag = 'internal scratch']
  %s0 = inlined_call_operand.hbm [shape: f32[4,8,32], index: 0, kind: input, shape index: {}]
  %s1 = inlined_call_operand.hbm [shape: f32[4,32,32], index: 1, kind: input, shape index: {}]
  %s2 = inlined_call_operand.vmem [shape: f32[4,1,32], index: 2, kind: input, shape index: {}]
  %s3 = inlined_call_operand.vmem [shape: f32[4,8,32], index: 3, kind: output, shape index: {}]
  %s4 = sld [smem:[#allocation0]]
  $region53: #{parallel_res_mlps_forward.4} parent=0
    _
  %s6 = ssub.s32 1, %s4
  %s7 = scalar_select 0, %s6, %s4
  $region1: #{parallel_res_mlps_forward.4} parent=0
    #allocation2 [shape = 'u8[16384]{0}', space=vmem, size = 0x4000, scoped, tag = 'input window, operand 0']
    #allocation3 [shape = 's32[2]{0}', space=sflag, size = 0x8, scoped, tag = 'scoped memory for parallel_res_mlps_forward.4']
    #allocation4 [shape = 'u8[65536]{0}', space=vmem, size = 0x10000, scoped, tag = 'input window, operand 1']
    #allocation5 [shape = 's32[2]{0}', space=sflag, size = 0x8, scoped, tag = 'scoped memory for parallel_res_mlps_forward.4']
    %8 = vsyncpa [#allocation3], 0
    %s9 = scalar_lea.sflag [#allocation3], 1
    %10 = vsyncpa %s9, 0
    %11 = vsyncpa [#allocation5], 0
    %s12 = scalar_lea.sflag [#allocation5], 1
    %13 = vsyncpa %s12, 0
    loop: start=0, step=1, limit=4
    $region2: #{parallel_res_mlps_forward.4} parent=1 // loop_pre_header
      _
    $region3: #{parallel_res_mlps_forward.4} parent=1 // loop_header
      %s15 = sphi 0, %s19
      %p16 = scmp.ge.s32.totalorder %s15, 4
      %s22 = sphi 0, %s48
      %s23 = sphi 0, %s44
      %s24 = sphi 0, %s40
      %s25 = sphi 0, %s36
      %s26 = sphi 0, %s22
      %s27 = sphi 0, %s23
      %s28 = sphi 0, %s24
      %s29 = sphi 0, %s25
      %s30 = sphi 0, %s26
      %s31 = sphi 0, %s27
      %s32 = sphi 0, %s28
      %s33 = sphi 0, %s29
      %s55 = sphi 0, %s57
      %s58 = sphi 0, %s55
      %s59 = sphi 0, %s58
      %s75 = sphi 0, %s59
      %s85 = sphi 0, %s87
      %s88 = sphi 0, %s85
      %s89 = sphi 0, %s88
      %s105 = sphi 0, %s89
      %s113 = sphi 0, %s115
      %s116 = sphi 0, %s113
      %s117 = sphi 0, %s116
      %s133 = sphi 0, %s117
      %s143 = sphi 0, %s145
      %s146 = sphi 0, %s143
      %s147 = sphi 0, %s146
      %s163 = sphi 0, %s147
    $region4: #{parallel_res_mlps_forward.4} parent=1 // loop_header_branch
      %18 = sbr.rel (%p16) target = $region8
    $region5: #{parallel_res_mlps_forward.4} parent=1 // loop_body
      %s20 = ssub.s32 %s15, 1
      %s21 = ssub.s32 %s15, 2
      %s34 = sadd.s32 1, %s25
      %p35 = scmp.ge.s32.totalorder %s34, 1
      %s36 = scalar_select %p35, 0, %s34
      %s37 = sadd.s32 1, %s24
      %s38 = scalar_select %p35, %s37, %s24
      %p39 = scmp.ge.s32.totalorder %s38, 1
      %s40 = scalar_select %p39, 0, %s38
      %s41 = sadd.s32 1, %s23
      %s42 = scalar_select %p39, %s41, %s23
      %p43 = scmp.ge.s32.totalorder %s42, 1
      %s44 = scalar_select %p43, 0, %s42
      %s45 = sadd.s32 1, %s22
      %s46 = scalar_select %p43, %s45, %s22
      %p47 = scmp.ge.s32.totalorder %s46, 2
      %s48 = scalar_select %p47, 0, %s46
      %s49 = ssub.s32 %s22, %s48
      %s50 = ssub.s32 %s24, %s40
      %s51 = sor.u32 %s49, %s50
      %s52 = ssub.s32 %s25, %s36
      %s53 = sor.u32 %s51, %s52
      %p54 = scmp.eq.s32.totalorder %s53, 0
      %s56 = sadd.s32 %s55, 1
      %s57 = scalar_select %p54, %s55, %s56
      %p60 = pneg %p54
      %p61 = scmp.eq.s32.totalorder %s15, 1
      %p62 = por %p60, %p61
      %p63 = scmp.ne.s32.totalorder %s55, %s58
      %p64 = scmp.eq.s32.totalorder %s15, 0
      %p65 = por %p63, %p64
      %p66 = scmp.ne.s32.totalorder %s55, %s58
      %p67 = scmp.eq.s32.totalorder %s20, 1
      %p68 = por %p66, %p67
      %p69 = scmp.ne.s32.totalorder %s58, %s59
      %p70 = scmp.eq.s32.totalorder %s20, 0
      %p71 = por %p69, %p70
      %p72 = scmp.ne.s32.totalorder %s58, %s59
      %p73 = scmp.eq.s32.totalorder %s21, 1
      %p74 = por %p72, %p73
      %p76 = scmp.ne.s32.totalorder %s59, %s75
      %p77 = scmp.eq.s32.totalorder %s21, 0
      %p78 = por %p76, %p77
      %s79 = ssub.s32 %s22, %s48
      %s80 = ssub.s32 %s25, %s36
      %s81 = sor.u32 %s79, %s80
      %s82 = ssub.s32 %s23, %s44
      %s83 = sor.u32 %s81, %s82
      %p84 = scmp.eq.s32.totalorder %s83, 0
      %s86 = sadd.s32 %s85, 1
      %s87 = scalar_select %p84, %s85, %s86
      %p90 = pneg %p84
      %p91 = scmp.eq.s32.totalorder %s15, 1
      %p92 = por %p90, %p91
      %p93 = scmp.ne.s32.totalorder %s85, %s88
      %p94 = scmp.eq.s32.totalorder %s15, 0
      %p95 = por %p93, %p94
      %p96 = scmp.ne.s32.totalorder %s85, %s88
      %p97 = scmp.eq.s32.totalorder %s20, 1
      %p98 = por %p96, %p97
      %p99 = scmp.ne.s32.totalorder %s88, %s89
      %p100 = scmp.eq.s32.totalorder %s20, 0
      %p101 = por %p99, %p100
      %p102 = scmp.ne.s32.totalorder %s88, %s89
      %p103 = scmp.eq.s32.totalorder %s21, 1
      %p104 = por %p102, %p103
      %p106 = scmp.ne.s32.totalorder %s89, %s105
      %p107 = scmp.eq.s32.totalorder %s21, 0
      %p108 = por %p106, %p107
      %s109 = ssub.s32 %s22, %s48
      %s110 = ssub.s32 %s23, %s44
      %s111 = sor.u32 %s109, %s110
      %p112 = scmp.eq.s32.totalorder %s111, 0
      %s114 = sadd.s32 %s113, 1
      %s115 = scalar_select %p112, %s113, %s114
      %p118 = pneg %p112
      %p119 = scmp.eq.s32.totalorder %s15, 1
      %p120 = por %p118, %p119
      %p121 = scmp.ne.s32.totalorder %s113, %s116
      %p122 = scmp.eq.s32.totalorder %s15, 0
      %p123 = por %p121, %p122
      %p124 = scmp.ne.s32.totalorder %s113, %s116
      %p125 = scmp.eq.s32.totalorder %s20, 1
      %p126 = por %p124, %p125
      %p127 = scmp.ne.s32.totalorder %s116, %s117
      %p128 = scmp.eq.s32.totalorder %s20, 0
      %p129 = por %p127, %p128
      %p130 = scmp.ne.s32.totalorder %s116, %s117
      %p131 = scmp.eq.s32.totalorder %s21, 1
      %p132 = por %p130, %p131
      %p134 = scmp.ne.s32.totalorder %s117, %s133
      %p135 = scmp.eq.s32.totalorder %s21, 0
      %p136 = por %p134, %p135
      %s137 = ssub.s32 %s22, %s48
      %s138 = ssub.s32 %s24, %s40
      %s139 = sor.u32 %s137, %s138
      %s140 = ssub.s32 %s23, %s44
      %s141 = sor.u32 %s139, %s140
      %p142 = scmp.eq.s32.totalorder %s141, 0
      %s144 = sadd.s32 %s143, 1
      %s145 = scalar_select %p142, %s143, %s144
      %p148 = pneg %p142
      %p149 = scmp.eq.s32.totalorder %s15, 1
      %p150 = por %p148, %p149
      %p151 = scmp.ne.s32.totalorder %s143, %s146
      %p152 = scmp.eq.s32.totalorder %s15, 0
      %p153 = por %p151, %p152
      %p154 = scmp.ne.s32.totalorder %s143, %s146
      %p155 = scmp.eq.s32.totalorder %s20, 1
      %p156 = por %p154, %p155
      %p157 = scmp.ne.s32.totalorder %s146, %s147
      %p158 = scmp.eq.s32.totalorder %s20, 0
      %p159 = por %p157, %p158
      %p160 = scmp.ne.s32.totalorder %s146, %s147
      %p161 = scmp.eq.s32.totalorder %s21, 1
      %p162 = por %p160, %p161
      %p164 = scmp.ne.s32.totalorder %s147, %s163
      %p165 = scmp.eq.s32.totalorder %s21, 0
      %p166 = por %p164, %p165
      %p167 = scmp.le.s32.totalorder 1, %s15
      %p168 = scmp.lt.s32.totalorder %s15, 3
      %p169 = pnand %p167, %p168
      %p170 = pneg %p169
      // Predicated region
      $region9: #{parallel_res_mlps_forward.4} parent=5 // pred_check
        _
      $region10: #{parallel_res_mlps_forward.4} parent=5 // pred_check_branch
        %172 = sbr.rel (%p169) target = $region12
      $region11: #{parallel_res_mlps_forward.4} parent=5 // pred_region
        %s173 = ssub.s32 %s15, 1
      $region12: #{parallel_res_mlps_forward.4} parent=5 // pred_fallthru
        _
      %p174 = scmp.lt.s32.totalorder %s15, 2
      // Predicated region
      $region13: #{parallel_res_mlps_forward.4} parent=5 // pred_check
        %p175 = pneg %p174
      $region14: #{parallel_res_mlps_forward.4} parent=5 // pred_check_branch
        %177 = sbr.rel (%p175) target = $region16
      $region15: #{parallel_res_mlps_forward.4} parent=5 // pred_region
        // Predicated region
        $region17: #{parallel_res_mlps_forward.4} parent=15 // pred_check
          %p178 = pneg %p65
        $region18: #{parallel_res_mlps_forward.4} parent=15 // pred_check_branch
          %180 = sbr.rel (%p178) target = $region20
        $region19: #{parallel_res_mlps_forward.4} parent=15 // pred_region
          %s181 = sand.u32 %s55, 1
          %s182 = scalar_lea.sflag [#allocation3], %s181
          %s183 = sand.u32 %s55, 1
          %s184 = smul.addr %s183, 16
          %s185 = scalar_lea.vmem [#allocation2], %s184
          %s186 = smul.u32 2, %s22
          %s188 = ssub.s32 256, 256
          %189 = vsyncadd %s182, %s188
          %s190 = sadd.s32 %s25, %s24
          %s191 = sadd.s32 %s190, %s186
          %s192 = smul.addr %s191, 128
          %s193 = scalar_lea.hbm %s0, %s192
          %s194 = sshll.u32 %s185, 4
          %s195 = int_to_ptr.vmem [resolvable:$true] %s194
          %200 = dma.hbm_to_vmem [thread:$0]  %s193, 256, %s195, %s182, 128, 128, 8
        $region20: #{parallel_res_mlps_forward.4} parent=15 // pred_fallthru
          _
        // Predicated region
        $region21: #{parallel_res_mlps_forward.4} parent=15 // pred_check
          %p201 = pneg %p95
        $region22: #{parallel_res_mlps_forward.4} parent=15 // pred_check_branch
          %203 = sbr.rel (%p201) target = $region24
        $region23: #{parallel_res_mlps_forward.4} parent=15 // pred_region
          %s204 = sand.u32 %s85, 1
          %s205 = scalar_lea.sflag [#allocation5], %s204
          %s206 = sand.u32 %s85, 1
          %s207 = smul.addr %s206, 64
          %s208 = scalar_lea.vmem [#allocation4], %s207
          %s209 = smul.u32 2, %s22
          %s210 = smul.u32 4, %s25
          %s212 = ssub.s32 1024, 1024
          %213 = vsyncadd %s205, %s212
          %s214 = sadd.s32 %s23, %s210
          %s215 = smul.addr %s209, 4
          %s216 = sadd.s32 %s214, %s215
          %s217 = smul.addr %s216, 128
          %s218 = scalar_lea.hbm %s1, %s217
          %s219 = sshll.u32 %s208, 4
          %s220 = int_to_ptr.vmem [resolvable:$true] %s219
          %225 = dma.hbm_to_vmem [thread:$0]  %s218, 1024, %s220, %s205, 128, 128, 8
        $region24: #{parallel_res_mlps_forward.4} parent=15 // pred_fallthru
          _
        // Predicated region
        $region25: #{parallel_res_mlps_forward.4} parent=15 // pred_check
          %p226 = pneg %p123
        $region26: #{parallel_res_mlps_forward.4} parent=15 // pred_check_branch
          %228 = sbr.rel (%p226) target = $region28
        $region27: #{parallel_res_mlps_forward.4} parent=15 // pred_region
          %s229 = smul.u32 2, %s22
          %p230 = scmp.lt.s32.totalorder %s229, 3
          %s231 = scalar_select %p230, %s229, 3
          %p232 = scmp.lt.s32.totalorder %s23, 0
          %s233 = scalar_select %p232, %s23, 0
          %s234 = sadd.s32 %s233, %s231
          %s235 = scalar_lea.vmem %s2, %s234
          %s236 = smul.u32 2, %s22
        $region28: #{parallel_res_mlps_forward.4} parent=15 // pred_fallthru
          _
      $region16: #{parallel_res_mlps_forward.4} parent=5 // pred_fallthru
        _
      %p237 = scmp.le.s32.totalorder 1, %s15
      %p238 = scmp.lt.s32.totalorder %s15, 3
      %p239 = pnand %p237, %p238
      %p240 = pneg %p239
      // Predicated region
      $region29: #{parallel_res_mlps_forward.4} parent=5 // pred_check
        _
      $region30: #{parallel_res_mlps_forward.4} parent=5 // pred_check_branch
        %242 = sbr.rel (%p239) target = $region32
      $region31: #{parallel_res_mlps_forward.4} parent=5 // pred_region
        %s243 = ssub.s32 %s15, 1
        %s244 = sand.u32 %s58, 1
        %s245 = scalar_lea.sflag [#allocation3], %s244
        %s246 = sand.u32 %s58, 1
        %s247 = smul.addr %s246, 16
        %s248 = scalar_lea.vmem [#allocation2], %s247
        // Predicated region
        $region33: #{parallel_res_mlps_forward.4} parent=31 // pred_check
          %p249 = pneg %p71
        $region34: #{parallel_res_mlps_forward.4} parent=31 // pred_check_branch
          %251 = sbr.rel (%p249) target = $region36
        $region35: #{parallel_res_mlps_forward.4} parent=31 // pred_region
          %252 = dma.done %s245, 256
        $region36: #{parallel_res_mlps_forward.4} parent=31 // pred_fallthru
          _
        %s253 = sand.u32 %s88, 1
        %s254 = scalar_lea.sflag [#allocation5], %s253
        %s255 = sand.u32 %s88, 1
        %s256 = smul.addr %s255, 64
        %s257 = scalar_lea.vmem [#allocation4], %s256
        // Predicated region
        $region37: #{parallel_res_mlps_forward.4} parent=31 // pred_check
          %p258 = pneg %p101
        $region38: #{parallel_res_mlps_forward.4} parent=31 // pred_check_branch
          %260 = sbr.rel (%p258) target = $region40
        $region39: #{parallel_res_mlps_forward.4} parent=31 // pred_region
          %261 = dma.done %s254, 1024
        $region40: #{parallel_res_mlps_forward.4} parent=31 // pred_fallthru
          _
        %s262 = sand.u32 %s58, 1
        %s263 = scalar_lea.sflag [#allocation3], %s262
        %s264 = sand.u32 %s58, 1
        %s265 = smul.addr %s264, 16
        %s266 = scalar_lea.vmem [#allocation2], %s265
        %p267 = pneg %p71
        %p268 = pneg %p68
        %s269 = sand.u32 %s88, 1
        %s270 = scalar_lea.sflag [#allocation5], %s269
        %s271 = sand.u32 %s88, 1
        %s272 = smul.addr %s271, 64
        %s273 = scalar_lea.vmem [#allocation4], %s272
        %p274 = pneg %p101
        %p275 = pneg %p98
        %s276 = smul.u32 2, %s26
        %p277 = scmp.lt.s32.totalorder %s276, 3
        %s278 = scalar_select %p277, %s276, 3
        %p279 = scmp.lt.s32.totalorder %s27, 0
        %s280 = scalar_select %p279, %s27, 0
        %s281 = sadd.s32 %s280, %s278
        %s282 = scalar_lea.vmem %s2, %s281
        %p283 = pneg %p129
        %p284 = pneg %p126
        %p285 = pneg %p159
        %p286 = pneg %p156
        %s287 = smul.u32 2, %s26
        %p288 = scmp.lt.s32.totalorder %s287, 3
        %s289 = scalar_select %p288, %s287, 3
        %p290 = scmp.lt.s32.totalorder %s28, 0
        %s291 = scalar_select %p290, %s28, 0
        %p292 = scmp.lt.s32.totalorder %s27, 0
        %s293 = scalar_select %p292, %s27, 0
        %s294 = sadd.s32 %s293, %s291
        %s295 = sadd.s32 %s294, %s289
        %s296 = smul.addr %s295, 8
        %s297 = scalar_lea.vmem %s3, %s296
        %s298 = smul.u32 2, %s26
        %s299 = smul.u32 2, %s26
        %s300 = smul.u32 4, %s29
        %s301 = smul.u32 2, %s26
        %p302 = scmp.lt.s32.totalorder %s301, 3
        %s303 = scalar_select %p302, %s301, 3
        %p304 = scmp.lt.s32.totalorder %s27, 0
        %s305 = scalar_select %p304, %s27, 0
        %s306 = sadd.s32 %s305, %s303
        %s307 = scalar_lea.vmem %s2, %s306
        %s308 = smul.u32 2, %s26
        %s309 = smul.u32 2, %s26
        %p310 = scmp.lt.s32.totalorder %s309, 3
        %s311 = scalar_select %p310, %s309, 3
        %p312 = scmp.lt.s32.totalorder %s28, 0
        %s313 = scalar_select %p312, %s28, 0
        %p314 = scmp.lt.s32.totalorder %s27, 0
        %s315 = scalar_select %p314, %s27, 0
        %s316 = sadd.s32 %s315, %s313
        %s317 = sadd.s32 %s316, %s311
        %s318 = smul.addr %s317, 8
        %s319 = scalar_lea.vmem %s3, %s318
        %s320 = smul.u32 2, %s26
        %v321 = vld [vmem:[%s248] sm:$0xff]
        %v322 = vld [vmem:[%s248 + $0x8] sm:$0xff]
        %v323 = vld [vmem:[%s257] sm:$0xff]
        %v324 = vld [vmem:[%s257 + $0x8] sm:$0xff]
        %v325 = vld [vmem:[%s257 + $0x10] sm:$0xff]
        %v326 = vld [vmem:[%s257 + $0x18] sm:$0xff]
        %v327 = vld [vmem:[%s257 + $0x20] sm:$0xff]
        %v328 = vld [vmem:[%s257 + $0x28] sm:$0xff]
        %v329 = vld [vmem:[%s257 + $0x30] sm:$0xff]
        %v330 = vld [vmem:[%s257 + $0x38] sm:$0xff]
        %v331 = vld [vmem:[%s307] sm:$0x1]
        %v332 = vld [vmem:[%s307 + $0x1] sm:$0x1]
        %v335 = vlaneseq
        %v336 = vshrl.u32 %v335, 7
        %v337 = vsub.s32 0, %v336
        %v338 = vrot.slane %v331, %v337
        %v339 = vlaneseq
        %v340 = vshrl.u32 %v339, 7
        %v341 = vsub.s32 0, %v340
        %v342 = vrot.slane %v332, %v341
        %vm345 = vcmask 261120
        %v347 = vsel %vm345, %v321, 0
        %349 = vmatprep.subr.mxu0 0.0
        %350 = vmatpush1.msra.mxu0 %v323
        %351 = vmatprep.subr.mxu0 0.0
        %352 = vmatpush1.msra.mxu0 %v324
        %353 = vmatprep.subr.mxu0 0.0
        %354 = vmatpush1.msra.mxu0 %v325
        %355 = vmatprep.subr.mxu0 0.0
        %356 = vmatpush1.msra.mxu0 %v326
        %357 = vmatprep.subr.mxu0 0.0
        %358 = vmatpush1.msra.mxu0 0.0
        %359 = vmatprep.subr.mxu0 0.0
        %360 = vmatpush1.msra.mxu0 0.0
        %361 = vmatprep.subr.mxu0 0.0
        %362 = vmatpush1.msra.mxu0 0.0
        %363 = vmatprep.subr.mxu0 0.0
        %364 = vmatpush1.msra.mxu0 0.0
        %365 = vmatprep.subr.mxu0 0.0
        %366 = vmatpush1.msra.mxu0 0.0
        %367 = vmatprep.subr.mxu0 0.0
        %368 = vmatpush1.msra.mxu0 0.0
        %369 = vmatprep.subr.mxu0 0.0
        %370 = vmatpush1.msra.mxu0 0.0
        %371 = vmatprep.subr.mxu0 0.0
        %372 = vmatpush1.msra.mxu0 0.0
        %373 = vmatprep.subr.mxu0 0.0
        %374 = vmatpush1.msra.mxu0 0.0
        %375 = vmatprep.subr.mxu0 0.0
        %376 = vmatpush1.msra.mxu0 0.0
        %377 = vmatprep.subr.mxu0 0.0
        %378 = vmatpush1.msra.mxu0 0.0
        %379 = vmatprep.subr.mxu0 0.0
        %380 = vmatpush1.msra.mxu0 0.0
        %381 = vmatprep.subr.mxu0 0.0
        %382 = vmatpush1.msra.mxu0 0.0
        %383 = vmatprep.subr.mxu0 0.0
        %384 = vmatpush1.msra.mxu0 0.0
        %385 = vmatprep.subr.mxu0 0.0
        %386 = vmatpush1.msra.mxu0 0.0
        %387 = vmatprep.subr.mxu0 0.0
        %388 = vmatpush1.msra.mxu0 0.0
        %389 = vmatprep.subr.mxu0 0.0
        %390 = vmatpush1.msra.mxu0 0.0
        %391 = vmatprep.subr.mxu0 0.0
        %392 = vmatpush1.msra.mxu0 0.0
        %393 = vmatprep.subr.mxu0 0.0
        %394 = vmatpush1.msra.mxu0 0.0
        %395 = vmatprep.subr.mxu0 0.0
        %396 = vmatpush1.msra.mxu0 0.0
        %397 = vmatprep.subr.mxu0 0.0
        %398 = vmatpush1.msra.mxu0 0.0
        %399 = vmatprep.subr.mxu0 0.0
        %400 = vmatpush1.msra.mxu0 0.0
        %401 = vmatprep.subr.mxu0 0.0
        %402 = vmatpush1.msra.mxu0 0.0
        %403 = vmatprep.subr.mxu0 0.0
        %404 = vmatpush1.msra.mxu0 0.0
        %405 = vmatprep.subr.mxu0 0.0
        %406 = vmatpush1.msra.mxu0 0.0
        %407 = vmatprep.subr.mxu0 0.0
        %408 = vmatpush1.msra.mxu0 0.0
        %409 = vmatprep.subr.mxu0 0.0
        %410 = vmatpush1.msra.mxu0 0.0
        %411 = vmatprep.subr.mxu0 0.0
        %412 = vmatpush1.msra.mxu0 0.0
        %413 = vmatprep.mubr.f32.mxu0 0.0
        %414 = vmatmul.mubr.f32.gmra.mrb[0].mxu0 %v347
        %v415 = vpop.f32.mrb[0].mxu0
        %v416 = vadd.f32 %v338, %v415
        %v417 = vpop.f32.mrb[0].mxu0
        %418 = vdwg.mxu0
        %v420 = vsel %vm345, %v322, 0
        %422 = vmatprep.subr.mxu0 0.0
        %423 = vmatpush1.msra.mxu0 %v327
        %424 = vmatprep.subr.mxu0 0.0
        %425 = vmatpush1.msra.mxu0 %v328
        %426 = vmatprep.subr.mxu0 0.0
        %427 = vmatpush1.msra.mxu0 %v329
        %428 = vmatprep.subr.mxu0 0.0
        %429 = vmatpush1.msra.mxu0 %v330
        %430 = vmatprep.subr.mxu0 0.0
        %431 = vmatpush1.msra.mxu0 0.0
        %432 = vmatprep.subr.mxu0 0.0
        %433 = vmatpush1.msra.mxu0 0.0
        %434 = vmatprep.subr.mxu0 0.0
        %435 = vmatpush1.msra.mxu0 0.0
        %436 = vmatprep.subr.mxu0 0.0
        %437 = vmatpush1.msra.mxu0 0.0
        %438 = vmatprep.subr.mxu0 0.0
        %439 = vmatpush1.msra.mxu0 0.0
        %440 = vmatprep.subr.mxu0 0.0
        %441 = vmatpush1.msra.mxu0 0.0
        %442 = vmatprep.subr.mxu0 0.0
        %443 = vmatpush1.msra.mxu0 0.0
        %444 = vmatprep.subr.mxu0 0.0
        %445 = vmatpush1.msra.mxu0 0.0
        %446 = vmatprep.subr.mxu0 0.0
        %447 = vmatpush1.msra.mxu0 0.0
        %448 = vmatprep.subr.mxu0 0.0
        %449 = vmatpush1.msra.mxu0 0.0
        %450 = vmatprep.subr.mxu0 0.0
        %451 = vmatpush1.msra.mxu0 0.0
        %452 = vmatprep.subr.mxu0 0.0
        %453 = vmatpush1.msra.mxu0 0.0
        %454 = vmatprep.subr.mxu0 0.0
        %455 = vmatpush1.msra.mxu0 0.0
        %456 = vmatprep.subr.mxu0 0.0
        %457 = vmatpush1.msra.mxu0 0.0
        %458 = vmatprep.subr.mxu0 0.0
        %459 = vmatpush1.msra.mxu0 0.0
        %460 = vmatprep.subr.mxu0 0.0
        %461 = vmatpush1.msra.mxu0 0.0
        %462 = vmatprep.subr.mxu0 0.0
        %463 = vmatpush1.msra.mxu0 0.0
        %464 = vmatprep.subr.mxu0 0.0
        %465 = vmatpush1.msra.mxu0 0.0
        %466 = vmatprep.subr.mxu0 0.0
        %467 = vmatpush1.msra.mxu0 0.0
        %468 = vmatprep.subr.mxu0 0.0
        %469 = vmatpush1.msra.mxu0 0.0
        %470 = vmatprep.subr.mxu0 0.0
        %471 = vmatpush1.msra.mxu0 0.0
        %472 = vmatprep.subr.mxu0 0.0
        %473 = vmatpush1.msra.mxu0 0.0
        %474 = vmatprep.subr.mxu0 0.0
        %475 = vmatpush1.msra.mxu0 0.0
        %476 = vmatprep.subr.mxu0 0.0
        %477 = vmatpush1.msra.mxu0 0.0
        %478 = vmatprep.subr.mxu0 0.0
        %479 = vmatpush1.msra.mxu0 0.0
        %480 = vmatprep.subr.mxu0 0.0
        %481 = vmatpush1.msra.mxu0 0.0
        %482 = vmatprep.subr.mxu0 0.0
        %483 = vmatpush1.msra.mxu0 0.0
        %484 = vmatprep.subr.mxu0 0.0
        %485 = vmatpush1.msra.mxu0 0.0
        %486 = vmatprep.mubr.f32.mxu0 0.0
        %487 = vmatmul.mubr.f32.gmra.mrb[0].mxu0 %v420
        %v488 = vpop.f32.mrb[0].mxu0
        %v489 = vadd.f32 %v342, %v488
        %v490 = vpop.f32.mrb[0].mxu0
        %491 = vdwg.mxu0
        %vm492 = vcmp.ge.f32.partialorder %v416, 0.0
        %vm493 = vcmp.ge.f32.partialorder %v489, 0.0
        %v494 = vmul.f32 %v416, 0.01
        %v495 = vmul.f32 %v489, 0.01
        %v496 = vsel %vm492, %v416, %v494
        %v497 = vsel %vm493, %v489, %v495
        %498 = vst.msk [vmem:[%s319] sm:$0xff] %vm345, %v496
        %499 = vst.msk [vmem:[%s319 + $0x8] sm:$0xff] %vm345, %v497
        %s500 = smul.u32 2, %s26
        %p501 = scmp.lt.s32.totalorder %s500, 3
        %s502 = scalar_select %p501, %s500, 3
        %p503 = scmp.lt.s32.totalorder %s28, 0
        %s504 = scalar_select %p503, %s28, 0
        %p505 = scmp.lt.s32.totalorder %s27, 0
        %s506 = scalar_select %p505, %s27, 0
        %s507 = sadd.s32 %s506, %s504
        %s508 = sadd.s32 %s507, %s502
        %s509 = smul.addr %s508, 8
        %s510 = scalar_lea.vmem %s3, %s509
        // Predicated region
        $region41: #{parallel_res_mlps_forward.4} parent=31 // pred_check
          %p511 = pneg %p156
        $region42: #{parallel_res_mlps_forward.4} parent=31 // pred_check_branch
          %513 = sbr.rel (%p511) target = $region44
        $region43: #{parallel_res_mlps_forward.4} parent=31 // pred_region
          %s514 = smul.u32 2, %s26
        $region44: #{parallel_res_mlps_forward.4} parent=31 // pred_fallthru
          _
      $region32: #{parallel_res_mlps_forward.4} parent=5 // pred_fallthru
        _
      %p515 = scmp.le.s32.totalorder 2, %s15
      // Predicated region
      $region45: #{parallel_res_mlps_forward.4} parent=5 // pred_check
        %p516 = pneg %p515
      $region46: #{parallel_res_mlps_forward.4} parent=5 // pred_check_branch
        %518 = sbr.rel (%p516) target = $region48
      $region47: #{parallel_res_mlps_forward.4} parent=5 // pred_region
        %s519 = ssub.s32 %s15, 2
        // Predicated region
        $region49: #{parallel_res_mlps_forward.4} parent=47 // pred_check
          %p520 = pneg %p162
        $region50: #{parallel_res_mlps_forward.4} parent=47 // pred_check_branch
          %522 = sbr.rel (%p520) target = $region52
        $region51: #{parallel_res_mlps_forward.4} parent=47 // pred_region
          %s523 = smul.u32 2, %s30
          %p524 = scmp.lt.s32.totalorder %s523, 3
          %s525 = scalar_select %p524, %s523, 3
          %p526 = scmp.lt.s32.totalorder %s32, 0
          %s527 = scalar_select %p526, %s32, 0
          %p528 = scmp.lt.s32.totalorder %s31, 0
          %s529 = scalar_select %p528, %s31, 0
          %s530 = sadd.s32 %s529, %s527
          %s531 = sadd.s32 %s530, %s525
          %s532 = smul.addr %s531, 8
          %s533 = scalar_lea.vmem %s3, %s532
        $region52: #{parallel_res_mlps_forward.4} parent=47 // pred_fallthru
          _
      $region48: #{parallel_res_mlps_forward.4} parent=5 // pred_fallthru
        _
    $region6: #{parallel_res_mlps_forward.4} parent=1 // loop_footer
      %s19 = sadd.s32 1, %s15
    $region7: #{parallel_res_mlps_forward.4} parent=1 // loop_footer_branch
      %14 = sbr.rel target = $region3
    $region8: #{parallel_res_mlps_forward.4} parent=1 // loop_exit
      _
    %534 = vsyncpa [#allocation3], 1
    %s535 = scalar_lea.sflag [#allocation3], 1
    %536 = vsyncpa %s535, 1
    %537 = vsyncpa [#allocation5], 1
    %s538 = scalar_lea.sflag [#allocation5], 1
    %539 = vsyncpa %s538, 1

// kernel: parallel_res_mlps_forward.6
$region0: #{parallel_res_mlps_forward.6}
  #allocation0 [shape = 'u32[]', space=smem, size = 0x4, offset = 0x4, fixed_abs, tag = 'smem constant byte address 0x4 - core index']
  #allocation1 [shape = 'u32[144,128]{1,0:T(1,128)}', space=vmem, size = 0x12000, scoped, tag = 'internal scratch']
  %s0 = inlined_call_operand.vmem [shape: f32[4,8,32], index: 0, kind: input, shape index: {}]
  %s1 = inlined_call_operand.vmem [shape: f32[4,32,32], index: 1, kind: input, shape index: {}]
  %s2 = inlined_call_operand.vmem [shape: f32[4,1,32], index: 2, kind: input, shape index: {}]
  %s3 = inlined_call_operand.vmem [shape: f32[4,32,32], index: 3, kind: input, shape index: {}]
  %s4 = inlined_call_operand.vmem [shape: f32[4,1,32], index: 4, kind: input, shape index: {}]
  %s5 = inlined_call_operand.vmem [shape: f32[4,8,32], index: 5, kind: output, shape index: {}]
  %s6 = sld [smem:[#allocation0]]
  $region53: #{parallel_res_mlps_forward.6} parent=0
    _
  %s8 = ssub.s32 1, %s6
  %s9 = scalar_select 0, %s8, %s6
  loop: start=0, step=1, limit=4
  $region2: #{parallel_res_mlps_forward.6} parent=0 // loop_pre_header
    _
  $region3: #{parallel_res_mlps_forward.6} parent=0 // loop_header
    %s11 = sphi 0, %s15
    %p12 = scmp.ge.s32.totalorder %s11, 4
    %s18 = sphi 0, %s30
    %s19 = sphi 0, %s26
    %s20 = sphi 0, %s18
    %s21 = sphi 0, %s19
    %s22 = sphi 0, %s20
    %s23 = sphi 0, %s21
    %s35 = sphi 0, %s37
    %s38 = sphi 0, %s35
    %s39 = sphi 0, %s38
    %s55 = sphi 0, %s39
    %s61 = sphi 0, %s63
    %s64 = sphi 0, %s61
    %s65 = sphi 0, %s64
    %s81 = sphi 0, %s65
    %s87 = sphi 0, %s89
    %s90 = sphi 0, %s87
    %s91 = sphi 0, %s90
    %s107 = sphi 0, %s91
    %s113 = sphi 0, %s115
    %s116 = sphi 0, %s113
    %s117 = sphi 0, %s116
    %s133 = sphi 0, %s117
    %s139 = sphi 0, %s141
    %s142 = sphi 0, %s139
    %s143 = sphi 0, %s142
    %s159 = sphi 0, %s143
    %s167 = sphi 0, %s169
    %s170 = sphi 0, %s167
    %s171 = sphi 0, %s170
    %s187 = sphi 0, %s171
  $region4: #{parallel_res_mlps_forward.6} parent=0 // loop_header_branch
    %14 = sbr.rel (%p12) target = $region8
  $region5: #{parallel_res_mlps_forward.6} parent=0 // loop_body
    %s16 = ssub.s32 %s11, 1
    %s17 = ssub.s32 %s11, 2
    %s24 = sadd.s32 1, %s19
    %p25 = scmp.ge.s32.totalorder %s24, 1
    %s26 = scalar_select %p25, 0, %s24
    %s27 = sadd.s32 1, %s18
    %s28 = scalar_select %p25, %s27, %s18
    %p29 = scmp.ge.s32.totalorder %s28, 2
    %s30 = scalar_select %p29, 0, %s28
    %s31 = ssub.s32 %s18, %s30
    %s32 = ssub.s32 %s19, %s26
    %s33 = sor.u32 %s31, %s32
    %p34 = scmp.eq.s32.totalorder %s33, 0
    %s36 = sadd.s32 %s35, 1
    %s37 = scalar_select %p34, %s35, %s36
    %p40 = pneg %p34
    %p41 = scmp.eq.s32.totalorder %s11, 1
    %p42 = por %p40, %p41
    %p43 = scmp.ne.s32.totalorder %s35, %s38
    %p44 = scmp.eq.s32.totalorder %s11, 0
    %p45 = por %p43, %p44
    %p46 = scmp.ne.s32.totalorder %s35, %s38
    %p47 = scmp.eq.s32.totalorder %s16, 1
    %p48 = por %p46, %p47
    %p49 = scmp.ne.s32.totalorder %s38, %s39
    %p50 = scmp.eq.s32.totalorder %s16, 0
    %p51 = por %p49, %p50
    %p52 = scmp.ne.s32.totalorder %s38, %s39
    %p53 = scmp.eq.s32.totalorder %s17, 1
    %p54 = por %p52, %p53
    %p56 = scmp.ne.s32.totalorder %s39, %s55
    %p57 = scmp.eq.s32.totalorder %s17, 0
    %p58 = por %p56, %p57
    %s59 = ssub.s32 %s18, %s30
    %p60 = scmp.eq.s32.totalorder %s59, 0
    %s62 = sadd.s32 %s61, 1
    %s63 = scalar_select %p60, %s61, %s62
    %p66 = pneg %p60
    %p67 = scmp.eq.s32.totalorder %s11, 1
    %p68 = por %p66, %p67
    %p69 = scmp.ne.s32.totalorder %s61, %s64
    %p70 = scmp.eq.s32.totalorder %s11, 0
    %p71 = por %p69, %p70
    %p72 = scmp.ne.s32.totalorder %s61, %s64
    %p73 = scmp.eq.s32.totalorder %s16, 1
    %p74 = por %p72, %p73
    %p75 = scmp.ne.s32.totalorder %s64, %s65
    %p76 = scmp.eq.s32.totalorder %s16, 0
    %p77 = por %p75, %p76
    %p78 = scmp.ne.s32.totalorder %s64, %s65
    %p79 = scmp.eq.s32.totalorder %s17, 1
    %p80 = por %p78, %p79
    %p82 = scmp.ne.s32.totalorder %s65, %s81
    %p83 = scmp.eq.s32.totalorder %s17, 0
    %p84 = por %p82, %p83
    %s85 = ssub.s32 %s18, %s30
    %p86 = scmp.eq.s32.totalorder %s85, 0
    %s88 = sadd.s32 %s87, 1
    %s89 = scalar_select %p86, %s87, %s88
    %p92 = pneg %p86
    %p93 = scmp.eq.s32.totalorder %s11, 1
    %p94 = por %p92, %p93
    %p95 = scmp.ne.s32.totalorder %s87, %s90
    %p96 = scmp.eq.s32.totalorder %s11, 0
    %p97 = por %p95, %p96
    %p98 = scmp.ne.s32.totalorder %s87, %s90
    %p99 = scmp.eq.s32.totalorder %s16, 1
    %p100 = por %p98, %p99
    %p101 = scmp.ne.s32.totalorder %s90, %s91
    %p102 = scmp.eq.s32.totalorder %s16, 0
    %p103 = por %p101, %p102
    %p104 = scmp.ne.s32.totalorder %s90, %s91
    %p105 = scmp.eq.s32.totalorder %s17, 1
    %p106 = por %p104, %p105
    %p108 = scmp.ne.s32.totalorder %s91, %s107
    %p109 = scmp.eq.s32.totalorder %s17, 0
    %p110 = por %p108, %p109
    %s111 = ssub.s32 %s18, %s30
    %p112 = scmp.eq.s32.totalorder %s111, 0
    %s114 = sadd.s32 %s113, 1
    %s115 = scalar_select %p112, %s113, %s114
    %p118 = pneg %p112
    %p119 = scmp.eq.s32.totalorder %s11, 1
    %p120 = por %p118, %p119
    %p121 = scmp.ne.s32.totalorder %s113, %s116
    %p122 = scmp.eq.s32.totalorder %s11, 0
    %p123 = por %p121, %p122
    %p124 = scmp.ne.s32.totalorder %s113, %s116
    %p125 = scmp.eq.s32.totalorder %s16, 1
    %p126 = por %p124, %p125
    %p127 = scmp.ne.s32.totalorder %s116, %s117
    %p128 = scmp.eq.s32.totalorder %s16, 0
    %p129 = por %p127, %p128
    %p130 = scmp.ne.s32.totalorder %s116, %s117
    %p131 = scmp.eq.s32.totalorder %s17, 1
    %p132 = por %p130, %p131
    %p134 = scmp.ne.s32.totalorder %s117, %s133
    %p135 = scmp.eq.s32.totalorder %s17, 0
    %p136 = por %p134, %p135
    %s137 = ssub.s32 %s18, %s30
    %p138 = scmp.eq.s32.totalorder %s137, 0
    %s140 = sadd.s32 %s139, 1
    %s141 = scalar_select %p138, %s139, %s140
    %p144 = pneg %p138
    %p145 = scmp.eq.s32.totalorder %s11, 1
    %p146 = por %p144, %p145
    %p147 = scmp.ne.s32.totalorder %s139, %s142
    %p148 = scmp.eq.s32.totalorder %s11, 0
    %p149 = por %p147, %p148
    %p150 = scmp.ne.s32.totalorder %s139, %s142
    %p151 = scmp.eq.s32.totalorder %s16, 1
    %p152 = por %p150, %p151
    %p153 = scmp.ne.s32.totalorder %s142, %s143
    %p154 = scmp.eq.s32.totalorder %s16, 0
    %p155 = por %p153, %p154
    %p156 = scmp.ne.s32.totalorder %s142, %s143
    %p157 = scmp.eq.s32.totalorder %s17, 1
    %p158 = por %p156, %p157
    %p160 = scmp.ne.s32.totalorder %s143, %s159
    %p161 = scmp.eq.s32.totalorder %s17, 0
    %p162 = por %p160, %p161
    %s163 = ssub.s32 %s18, %s30
    %s164 = ssub.s32 %s19, %s26
    %s165 = sor.u32 %s163, %s164
    %p166 = scmp.eq.s32.totalorder %s165, 0
    %s168 = sadd.s32 %s167, 1
    %s169 = scalar_select %p166, %s167, %s168
    %p172 = pneg %p166
    %p173 = scmp.eq.s32.totalorder %s11, 1
    %p174 = por %p172, %p173
    %p175 = scmp.ne.s32.totalorder %s167, %s170
    %p176 = scmp.eq.s32.totalorder %s11, 0
    %p177 = por %p175, %p176
    %p178 = scmp.ne.s32.totalorder %s167, %s170
    %p179 = scmp.eq.s32.totalorder %s16, 1
    %p180 = por %p178, %p179
    %p181 = scmp.ne.s32.totalorder %s170, %s171
    %p182 = scmp.eq.s32.totalorder %s16, 0
    %p183 = por %p181, %p182
    %p184 = scmp.ne.s32.totalorder %s170, %s171
    %p185 = scmp.eq.s32.totalorder %s17, 1
    %p186 = por %p184, %p185
    %p188 = scmp.ne.s32.totalorder %s171, %s187
    %p189 = scmp.eq.s32.totalorder %s17, 0
    %p190 = por %p188, %p189
    %p191 = scmp.le.s32.totalorder 1, %s11
    %p192 = scmp.lt.s32.totalorder %s11, 3
    %p193 = pnand %p191, %p192
    %p194 = pneg %p193
    // Predicated region
    $region9: #{parallel_res_mlps_forward.6} parent=5 // pred_check
      _
    $region10: #{parallel_res_mlps_forward.6} parent=5 // pred_check_branch
      %196 = sbr.rel (%p193) target = $region12
    $region11: #{parallel_res_mlps_forward.6} parent=5 // pred_region
      %s197 = ssub.s32 %s11, 1
    $region12: #{parallel_res_mlps_forward.6} parent=5 // pred_fallthru
      _
    %p198 = scmp.lt.s32.totalorder %s11, 2
    // Predicated region
    $region13: #{parallel_res_mlps_forward.6} parent=5 // pred_check
      %p199 = pneg %p198
    $region14: #{parallel_res_mlps_forward.6} parent=5 // pred_check_branch
      %201 = sbr.rel (%p199) target = $region16
    $region15: #{parallel_res_mlps_forward.6} parent=5 // pred_region
      // Predicated region
      $region17: #{parallel_res_mlps_forward.6} parent=15 // pred_check
        %p202 = pneg %p45
      $region18: #{parallel_res_mlps_forward.6} parent=15 // pred_check_branch
        %204 = sbr.rel (%p202) target = $region20
      $region19: #{parallel_res_mlps_forward.6} parent=15 // pred_region
        %s205 = smul.u32 2, %s18
        %p206 = scmp.lt.s32.totalorder %s205, 3
        %s207 = scalar_select %p206, %s205, 3
        %p208 = scmp.lt.s32.totalorder %s19, 0
        %s209 = scalar_select %p208, %s19, 0
        %s210 = sadd.s32 %s209, %s207
        %s211 = smul.addr %s210, 8
        %s212 = scalar_lea.vmem %s0, %s211
        %s213 = smul.u32 2, %s18
      $region20: #{parallel_res_mlps_forward.6} parent=15 // pred_fallthru
        _
      // Predicated region
      $region21: #{parallel_res_mlps_forward.6} parent=15 // pred_check
        %p214 = pneg %p71
      $region22: #{parallel_res_mlps_forward.6} parent=15 // pred_check_branch
        %216 = sbr.rel (%p214) target = $region24
      $region23: #{parallel_res_mlps_forward.6} parent=15 // pred_region
        %s217 = smul.u32 2, %s18
        %p218 = scmp.lt.s32.totalorder %s217, 3
        %s219 = scalar_select %p218, %s217, 3
        %s220 = smul.addr %s219, 4
        %s221 = smul.addr %s220, 8
        %s222 = scalar_lea.vmem %s1, %s221
        %s223 = smul.u32 2, %s18
      $region24: #{parallel_res_mlps_forward.6} parent=15 // pred_fallthru
        _
      // Predicated region
      $region25: #{parallel_res_mlps_forward.6} parent=15 // pred_check
        %p224 = pneg %p97
      $region26: #{parallel_res_mlps_forward.6} parent=15 // pred_check_branch
        %226 = sbr.rel (%p224) target = $region28
      $region27: #{parallel_res_mlps_forward.6} parent=15 // pred_region
        %s227 = smul.u32 2, %s18
        %p228 = scmp.lt.s32.totalorder %s227, 3
        %s229 = scalar_select %p228, %s227, 3
        %s230 = scalar_lea.vmem %s2, %s229
        %s231 = smul.u32 2, %s18
      $region28: #{parallel_res_mlps_forward.6} parent=15 // pred_fallthru
        _
      // Predicated region
      $region29: #{parallel_res_mlps_forward.6} parent=15 // pred_check
        %p232 = pneg %p123
      $region30: #{parallel_res_mlps_forward.6} parent=15 // pred_check_branch
        %234 = sbr.rel (%p232) target = $region32
      $region31: #{parallel_res_mlps_forward.6} parent=15 // pred_region
        %s235 = smul.u32 2, %s18
        %p236 = scmp.lt.s32.totalorder %s235, 3
        %s237 = scalar_select %p236, %s235, 3
        %s238 = smul.addr %s237, 4
        %s239 = smul.addr %s238, 8
        %s240 = scalar_lea.vmem %s3, %s239
        %s241 = smul.u32 2, %s18
      $region32: #{parallel_res_mlps_forward.6} parent=15 // pred_fallthru
        _
      // Predicated region
      $region33: #{parallel_res_mlps_forward.6} parent=15 // pred_check
        %p242 = pneg %p149
      $region34: #{parallel_res_mlps_forward.6} parent=15 // pred_check_branch
        %244 = sbr.rel (%p242) target = $region36
      $region35: #{parallel_res_mlps_forward.6} parent=15 // pred_region
        %s245 = smul.u32 2, %s18
        %p246 = scmp.lt.s32.totalorder %s245, 3
        %s247 = scalar_select %p246, %s245, 3
        %s248 = scalar_lea.vmem %s4, %s247
        %s249 = smul.u32 2, %s18
      $region36: #{parallel_res_mlps_forward.6} parent=15 // pred_fallthru
        _
    $region16: #{parallel_res_mlps_forward.6} parent=5 // pred_fallthru
      _
    %p250 = scmp.le.s32.totalorder 1, %s11
    %p251 = scmp.lt.s32.totalorder %s11, 3
    %p252 = pnand %p250, %p251
    %p253 = pneg %p252
    // Predicated region
    $region37: #{parallel_res_mlps_forward.6} parent=5 // pred_check
      _
    $region38: #{parallel_res_mlps_forward.6} parent=5 // pred_check_branch
      %255 = sbr.rel (%p252) target = $region40
    $region39: #{parallel_res_mlps_forward.6} parent=5 // pred_region
      %s256 = ssub.s32 %s11, 1
      %s257 = smul.u32 2, %s20
      %p258 = scmp.lt.s32.totalorder %s257, 3
      %s259 = scalar_select %p258, %s257, 3
      %p260 = scmp.lt.s32.totalorder %s21, 0
      %s261 = scalar_select %p260, %s21, 0
      %s262 = sadd.s32 %s261, %s259
      %s263 = smul.addr %s262, 8
      %s264 = scalar_lea.vmem %s0, %s263
      %p265 = pneg %p51
      %p266 = pneg %p48
      %s267 = smul.u32 2, %s20
      %p268 = scmp.lt.s32.totalorder %s267, 3
      %s269 = scalar_select %p268, %s267, 3
      %s270 = smul.addr %s269, 4
      %s271 = smul.addr %s270, 8
      %s272 = scalar_lea.vmem %s1, %s271
      %p273 = pneg %p77
      %p274 = pneg %p74
      %s275 = smul.u32 2, %s20
      %p276 = scmp.lt.s32.totalorder %s275, 3
      %s277 = scalar_select %p276, %s275, 3
      %s278 = scalar_lea.vmem %s2, %s277
      %p279 = pneg %p103
      %p280 = pneg %p100
      %s281 = smul.u32 2, %s20
      %p282 = scmp.lt.s32.totalorder %s281, 3
      %s283 = scalar_select %p282, %s281, 3
      %s284 = smul.addr %s283, 4
      %s285 = smul.addr %s284, 8
      %s286 = scalar_lea.vmem %s3, %s285
      %p287 = pneg %p129
      %p288 = pneg %p126
      %s289 = smul.u32 2, %s20
      %p290 = scmp.lt.s32.totalorder %s289, 3
      %s291 = scalar_select %p290, %s289, 3
      %s292 = scalar_lea.vmem %s4, %s291
      %p293 = pneg %p155
      %p294 = pneg %p152
      %p295 = pneg %p183
      %p296 = pneg %p180
      %s297 = smul.u32 2, %s20
      %p298 = scmp.lt.s32.totalorder %s297, 3
      %s299 = scalar_select %p298, %s297, 3
      %p300 = scmp.lt.s32.totalorder %s21, 0
      %s301 = scalar_select %p300, %s21, 0
      %s302 = sadd.s32 %s301, %s299
      %s303 = smul.addr %s302, 8
      %s304 = scalar_lea.vmem %s5, %s303
      %s305 = smul.u32 2, %s20
      %p306 = scmp.lt.s32.totalorder %s305, 3
      %s307 = scalar_select %p306, %s305, 3
      %p308 = scmp.lt.s32.totalorder %s21, 0
      %s309 = scalar_select %p308, %s21, 0
      %s310 = sadd.s32 %s309, %s307
      %s311 = smul.addr %s310, 8
      %s312 = scalar_lea.vmem %s0, %s311
      %s313 = smul.u32 2, %s20
      %s314 = smul.u32 2, %s20
      %p315 = scmp.lt.s32.totalorder %s314, 3
      %s316 = scalar_select %p315, %s314, 3
      %s317 = smul.addr %s316, 4
      %s318 = smul.addr %s317, 8
      %s319 = scalar_lea.vmem %s1, %s318
      %s320 = smul.u32 2, %s20
      %s321 = smul.u32 2, %s20
      %p322 = scmp.lt.s32.totalorder %s321, 3
      %s323 = scalar_select %p322, %s321, 3
      %s324 = scalar_lea.vmem %s2, %s323
      %s325 = smul.u32 2, %s20
      %s326 = smul.u32 2, %s20
      %p327 = scmp.lt.s32.totalorder %s326, 3
      %s328 = scalar_select %p327, %s326, 3
      %s329 = smul.addr %s328, 4
      %s330 = smul.addr %s329, 8
      %s331 = scalar_lea.vmem %s3, %s330
      %s332 = smul.u32 2, %s20
      %s333 = smul.u32 2, %s20
      %p334 = scmp.lt.s32.totalorder %s333, 3
      %s335 = scalar_select %p334, %s333, 3
      %s336 = scalar_lea.vmem %s4, %s335
      %s337 = smul.u32 2, %s20
      %s338 = smul.u32 2, %s20
      %p339 = scmp.lt.s32.totalorder %s338, 3
      %s340 = scalar_select %p339, %s338, 3
      %p341 = scmp.lt.s32.totalorder %s21, 0
      %s342 = scalar_select %p341, %s21, 0
      %s343 = sadd.s32 %s342, %s340
      %s344 = smul.addr %s343, 8
      %s345 = scalar_lea.vmem %s5, %s344
      %s346 = smul.u32 2, %s20
      %v347 = vld [vmem:[%s312] sm:$0xff]
      %v348 = vld [vmem:[%s312 + $0x8] sm:$0xff]
      %v349 = vld [vmem:[%s319] sm:$0xff]
      %v350 = vld [vmem:[%s319 + $0x8] sm:$0xff]
      %v351 = vld [vmem:[%s319 + $0x10] sm:$0xff]
      %v352 = vld [vmem:[%s319 + $0x18] sm:$0xff]
      %v353 = vld [vmem:[%s319 + $0x20] sm:$0xff]
      %v354 = vld [vmem:[%s319 + $0x28] sm:$0xff]
      %v355 = vld [vmem:[%s319 + $0x30] sm:$0xff]
      %v356 = vld [vmem:[%s319 + $0x38] sm:$0xff]
      %v357 = vld [vmem:[%s324] sm:$0x1]
      %v358 = vld [vmem:[%s324 + $0x1] sm:$0x1]
      %v361 = vlaneseq
      %v362 = vshrl.u32 %v361, 7
      %v363 = vsub.s32 0, %v362
      %v364 = vrot.slane %v357, %v363
      %v365 = vlaneseq
      %v366 = vshrl.u32 %v365, 7
      %v367 = vsub.s32 0, %v366
      %v368 = vrot.slane %v358, %v367
      %vm371 = vcmask 261120
      %v373 = vsel %vm371, %v347, 0
      %375 = vmatprep.subr.mxu0 0.0
      %376 = vmatpush1.msra.mxu0 %v349
      %377 = vmatprep.subr.mxu0 0.0
      %378 = vmatpush1.msra.mxu0 %v350
      %379 = vmatprep.subr.mxu0 0.0
      %380 = vmatpush1.msra.mxu0 %v351
      %381 = vmatprep.subr.mxu0 0.0
      %382 = vmatpush1.msra.mxu0 %v352
      %383 = vmatprep.subr.mxu0 0.0
      %384 = vmatpush1.msra.mxu0 0.0
      %385 = vmatprep.subr.mxu0 0.0
      %386 = vmatpush1.msra.mxu0 0.0
      %387 = vmatprep.subr.mxu0 0.0
      %388 = vmatpush1.msra.mxu0 0.0
      %389 = vmatprep.subr.mxu0 0.0
      %390 = vmatpush1.msra.mxu0 0.0
      %391 = vmatprep.subr.mxu0 0.0
      %392 = vmatpush1.msra.mxu0 0.0
      %393 = vmatprep.subr.mxu0 0.0
      %394 = vmatpush1.msra.mxu0 0.0
      %395 = vmatprep.subr.mxu0 0.0
      %396 = vmatpush1.msra.mxu0 0.0
      %397 = vmatprep.subr.mxu0 0.0
      %398 = vmatpush1.msra.mxu0 0.0
      %399 = vmatprep.subr.mxu0 0.0
      %400 = vmatpush1.msra.mxu0 0.0
      %401 = vmatprep.subr.mxu0 0.0
      %402 = vmatpush1.msra.mxu0 0.0
      %403 = vmatprep.subr.mxu0 0.0
      %404 = vmatpush1.msra.mxu0 0.0
      %405 = vmatprep.subr.mxu0 0.0
      %406 = vmatpush1.msra.mxu0 0.0
      %407 = vmatprep.subr.mxu0 0.0
      %408 = vmatpush1.msra.mxu0 0.0
      %409 = vmatprep.subr.mxu0 0.0
      %410 = vmatpush1.msra.mxu0 0.0
      %411 = vmatprep.subr.mxu0 0.0
      %412 = vmatpush1.msra.mxu0 0.0
      %413 = vmatprep.subr.mxu0 0.0
      %414 = vmatpush1.msra.mxu0 0.0
      %415 = vmatprep.subr.mxu0 0.0
      %416 = vmatpush1.msra.mxu0 0.0
      %417 = vmatprep.subr.mxu0 0.0
      %418 = vmatpush1.msra.mxu0 0.0
      %419 = vmatprep.subr.mxu0 0.0
      %420 = vmatpush1.msra.mxu0 0.0
      %421 = vmatprep.subr.mxu0 0.0
      %422 = vmatpush1.msra.mxu0 0.0
      %423 = vmatprep.subr.mxu0 0.0
      %424 = vmatpush1.msra.mxu0 0.0
      %425 = vmatprep.subr.mxu0 0.0
      %426 = vmatpush1.msra.mxu0 0.0
      %427 = vmatprep.subr.mxu0 0.0
      %428 = vmatpush1.msra.mxu0 0.0
      %429 = vmatprep.subr.mxu0 0.0
      %430 = vmatpush1.msra.mxu0 0.0
      %431 = vmatprep.subr.mxu0 0.0
      %432 = vmatpush1.msra.mxu0 0.0
      %433 = vmatprep.subr.mxu0 0.0
      %434 = vmatpush1.msra.mxu0 0.0
      %435 = vmatprep.subr.mxu0 0.0
      %436 = vmatpush1.msra.mxu0 0.0
      %437 = vmatprep.subr.mxu0 0.0
      %438 = vmatpush1.msra.mxu0 0.0
      %439 = vmatprep.mubr.f32.mxu0 0.0
      %440 = vmatmul.mubr.f32.gmra.mrb[0].mxu0 %v373
      %v441 = vpop.f32.mrb[0].mxu0
      %v442 = vadd.f32 %v364, %v441
      %v443 = vpop.f32.mrb[0].mxu0
      %444 = vdwg.mxu0
      %v446 = vsel %vm371, %v348, 0
      %448 = vmatprep.subr.mxu0 0.0
      %449 = vmatpush1.msra.mxu0 %v353
      %450 = vmatprep.subr.mxu0 0.0
      %451 = vmatpush1.msra.mxu0 %v354
      %452 = vmatprep.subr.mxu0 0.0
      %453 = vmatpush1.msra.mxu0 %v355
      %454 = vmatprep.subr.mxu0 0.0
      %455 = vmatpush1.msra.mxu0 %v356
      %456 = vmatprep.subr.mxu0 0.0
      %457 = vmatpush1.msra.mxu0 0.0
      %458 = vmatprep.subr.mxu0 0.0
      %459 = vmatpush1.msra.mxu0 0.0
      %460 = vmatprep.subr.mxu0 0.0
      %461 = vmatpush1.msra.mxu0 0.0
      %462 = vmatprep.subr.mxu0 0.0
      %463 = vmatpush1.msra.mxu0 0.0
      %464 = vmatprep.subr.mxu0 0.0
      %465 = vmatpush1.msra.mxu0 0.0
      %466 = vmatprep.subr.mxu0 0.0
      %467 = vmatpush1.msra.mxu0 0.0
      %468 = vmatprep.subr.mxu0 0.0
      %469 = vmatpush1.msra.mxu0 0.0
      %470 = vmatprep.subr.mxu0 0.0
      %471 = vmatpush1.msra.mxu0 0.0
      %472 = vmatprep.subr.mxu0 0.0
      %473 = vmatpush1.msra.mxu0 0.0
      %474 = vmatprep.subr.mxu0 0.0
      %475 = vmatpush1.msra.mxu0 0.0
      %476 = vmatprep.subr.mxu0 0.0
      %477 = vmatpush1.msra.mxu0 0.0
      %478 = vmatprep.subr.mxu0 0.0
      %479 = vmatpush1.msra.mxu0 0.0
      %480 = vmatprep.subr.mxu0 0.0
      %481 = vmatpush1.msra.mxu0 0.0
      %482 = vmatprep.subr.mxu0 0.0
      %483 = vmatpush1.msra.mxu0 0.0
      %484 = vmatprep.subr.mxu0 0.0
      %485 = vmatpush1.msra.mxu0 0.0
      %486 = vmatprep.subr.mxu0 0.0
      %487 = vmatpush1.msra.mxu0 0.0
      %488 = vmatprep.subr.mxu0 0.0
      %489 = vmatpush1.msra.mxu0 0.0
      %490 = vmatprep.subr.mxu0 0.0
      %491 = vmatpush1.msra.mxu0 0.0
      %492 = vmatprep.subr.mxu0 0.0
      %493 = vmatpush1.msra.mxu0 0.0
      %494 = vmatprep.subr.mxu0 0.0
      %495 = vmatpush1.msra.mxu0 0.0
      %496 = vmatprep.subr.mxu0 0.0
      %497 = vmatpush1.msra.mxu0 0.0
      %498 = vmatprep.subr.mxu0 0.0
      %499 = vmatpush1.msra.mxu0 0.0
      %500 = vmatprep.subr.mxu0 0.0
      %501 = vmatpush1.msra.mxu0 0.0
      %502 = vmatprep.subr.mxu0 0.0
      %503 = vmatpush1.msra.mxu0 0.0
      %504 = vmatprep.subr.mxu0 0.0
      %505 = vmatpush1.msra.mxu0 0.0
      %506 = vmatprep.subr.mxu0 0.0
      %507 = vmatpush1.msra.mxu0 0.0
      %508 = vmatprep.subr.mxu0 0.0
      %509 = vmatpush1.msra.mxu0 0.0
      %510 = vmatprep.subr.mxu0 0.0
      %511 = vmatpush1.msra.mxu0 0.0
      %512 = vmatprep.mubr.f32.mxu0 0.0
      %513 = vmatmul.mubr.f32.gmra.mrb[0].mxu0 %v446
      %v514 = vpop.f32.mrb[0].mxu0
      %v515 = vadd.f32 %v368, %v514
      %v516 = vpop.f32.mrb[0].mxu0
      %517 = vdwg.mxu0
      %vm518 = vcmp.ge.f32.partialorder %v442, 0.0
      %vm519 = vcmp.ge.f32.partialorder %v515, 0.0
      %v520 = vmul.f32 %v442, 0.01
      %v521 = vmul.f32 %v515, 0.01
      %v522 = vsel %vm518, %v442, %v520
      %v523 = vsel %vm519, %v515, %v521
      %v524 = vld [vmem:[%s331] sm:$0xff]
      %v525 = vld [vmem:[%s331 + $0x8] sm:$0xff]
      %v526 = vld [vmem:[%s331 + $0x10] sm:$0xff]
      %v527 = vld [vmem:[%s331 + $0x18] sm:$0xff]
      %v528 = vld [vmem:[%s331 + $0x20] sm:$0xff]
      %v529 = vld [vmem:[%s331 + $0x28] sm:$0xff]
      %v530 = vld [vmem:[%s331 + $0x30] sm:$0xff]
      %v531 = vld [vmem:[%s331 + $0x38] sm:$0xff]
      %v532 = vld [vmem:[%s336] sm:$0x1]
      %v533 = vld [vmem:[%s336 + $0x1] sm:$0x1]
      %v536 = vlaneseq
      %v537 = vshrl.u32 %v536, 7
      %v538 = vsub.s32 0, %v537
      %v539 = vrot.slane %v532, %v538
      %v540 = vlaneseq
      %v541 = vshrl.u32 %v540, 7
      %v542 = vsub.s32 0, %v541
      %v543 = vrot.slane %v533, %v542
      %v547 = vsel %vm371, %v522, 0
      %549 = vmatprep.subr.mxu0 0.0
      %550 = vmatpush1.msra.mxu0 %v524
      %551 = vmatprep.subr.mxu0 0.0
      %552 = vmatpush1.msra.mxu0 %v525
      %553 = vmatprep.subr.mxu0 0.0
      %554 = vmatpush1.msra.mxu0 %v526
      %555 = vmatprep.subr.mxu0 0.0
      %556 = vmatpush1.msra.mxu0 %v527
      %557 = vmatprep.subr.mxu0 0.0
      %558 = vmatpush1.msra.mxu0 0.0
      %559 = vmatprep.subr.mxu0 0.0
      %560 = vmatpush1.msra.mxu0 0.0
      %561 = vmatprep.subr.mxu0 0.0
      %562 = vmatpush1.msra.mxu0 0.0
      %563 = vmatprep.subr.mxu0 0.0
      %564 = vmatpush1.msra.mxu0 0.0
      %565 = vmatprep.subr.mxu0 0.0
      %566 = vmatpush1.msra.mxu0 0.0
      %567 = vmatprep.subr.mxu0 0.0
      %568 = vmatpush1.msra.mxu0 0.0
      %569 = vmatprep.subr.mxu0 0.0
      %570 = vmatpush1.msra.mxu0 0.0
      %571 = vmatprep.subr.mxu0 0.0
      %572 = vmatpush1.msra.mxu0 0.0
      %573 = vmatprep.subr.mxu0 0.0
      %574 = vmatpush1.msra.mxu0 0.0
      %575 = vmatprep.subr.mxu0 0.0
      %576 = vmatpush1.msra.mxu0 0.0
      %577 = vmatprep.subr.mxu0 0.0
      %578 = vmatpush1.msra.mxu0 0.0
      %579 = vmatprep.subr.mxu0 0.0
      %580 = vmatpush1.msra.mxu0 0.0
      %581 = vmatprep.subr.mxu0 0.0
      %582 = vmatpush1.msra.mxu0 0.0
      %583 = vmatprep.subr.mxu0 0.0
      %584 = vmatpush1.msra.mxu0 0.0
      %585 = vmatprep.subr.mxu0 0.0
      %586 = vmatpush1.msra.mxu0 0.0
      %587 = vmatprep.subr.mxu0 0.0
      %588 = vmatpush1.msra.mxu0 0.0
      %589 = vmatprep.subr.mxu0 0.0
      %590 = vmatpush1.msra.mxu0 0.0
      %591 = vmatprep.subr.mxu0 0.0
      %592 = vmatpush1.msra.mxu0 0.0
      %593 = vmatprep.subr.mxu0 0.0
      %594 = vmatpush1.msra.mxu0 0.0
      %595 = vmatprep.subr.mxu0 0.0
      %596 = vmatpush1.msra.mxu0 0.0
      %597 = vmatprep.subr.mxu0 0.0
      %598 = vmatpush1.msra.mxu0 0.0
      %599 = vmatprep.subr.mxu0 0.0
      %600 = vmatpush1.msra.mxu0 0.0
      %601 = vmatprep.subr.mxu0 0.0
      %602 = vmatpush1.msra.mxu0 0.0
      %603 = vmatprep.subr.mxu0 0.0
      %604 = vmatpush1.msra.mxu0 0.0
      %605 = vmatprep.subr.mxu0 0.0
      %606 = vmatpush1.msra.mxu0 0.0
      %607 = vmatprep.subr.mxu0 0.0
      %608 = vmatpush1.msra.mxu0 0.0
      %609 = vmatprep.subr.mxu0 0.0
      %610 = vmatpush1.msra.mxu0 0.0
      %611 = vmatprep.subr.mxu0 0.0
      %612 = vmatpush1.msra.mxu0 0.0
      %613 = vmatprep.mubr.f32.mxu0 0.0
      %614 = vmatmul.mubr.f32.gmra.mrb[0].mxu0 %v547
      %v615 = vpop.f32.mrb[0].mxu0
      %v616 = vadd.f32 %v539, %v615
      %v617 = vpop.f32.mrb[0].mxu0
      %618 = vdwg.mxu0
      %v620 = vsel %vm371, %v523, 0
      %622 = vmatprep.subr.mxu0 0.0
      %623 = vmatpush1.msra.mxu0 %v528
      %624 = vmatprep.subr.mxu0 0.0
      %625 = vmatpush1.msra.mxu0 %v529
      %626 = vmatprep.subr.mxu0 0.0
      %627 = vmatpush1.msra.mxu0 %v530
      %628 = vmatprep.subr.mxu0 0.0
      %629 = vmatpush1.msra.mxu0 %v531
      %630 = vmatprep.subr.mxu0 0.0
      %631 = vmatpush1.msra.mxu0 0.0
      %632 = vmatprep.subr.mxu0 0.0
      %633 = vmatpush1.msra.mxu0 0.0
      %634 = vmatprep.subr.mxu0 0.0
      %635 = vmatpush1.msra.mxu0 0.0
      %636 = vmatprep.subr.mxu0 0.0
      %637 = vmatpush1.msra.mxu0 0.0
      %638 = vmatprep.subr.mxu0 0.0
      %639 = vmatpush1.msra.mxu0 0.0
      %640 = vmatprep.subr.mxu0 0.0
      %641 = vmatpush1.msra.mxu0 0.0
      %642 = vmatprep.subr.mxu0 0.0
      %643 = vmatpush1.msra.mxu0 0.0
      %644 = vmatprep.subr.mxu0 0.0
      %645 = vmatpush1.msra.mxu0 0.0
      %646 = vmatprep.subr.mxu0 0.0
      %647 = vmatpush1.msra.mxu0 0.0
      %648 = vmatprep.subr.mxu0 0.0
      %649 = vmatpush1.msra.mxu0 0.0
      %650 = vmatprep.subr.mxu0 0.0
      %651 = vmatpush1.msra.mxu0 0.0
      %652 = vmatprep.subr.mxu0 0.0
      %653 = vmatpush1.msra.mxu0 0.0
      %654 = vmatprep.subr.mxu0 0.0
      %655 = vmatpush1.msra.mxu0 0.0
      %656 = vmatprep.subr.mxu0 0.0
      %657 = vmatpush1.msra.mxu0 0.0
      %658 = vmatprep.subr.mxu0 0.0
      %659 = vmatpush1.msra.mxu0 0.0
      %660 = vmatprep.subr.mxu0 0.0
      %661 = vmatpush1.msra.mxu0 0.0
      %662 = vmatprep.subr.mxu0 0.0
      %663 = vmatpush1.msra.mxu0 0.0
      %664 = vmatprep.subr.mxu0 0.0
      %665 = vmatpush1.msra.mxu0 0.0
      %666 = vmatprep.subr.mxu0 0.0
      %667 = vmatpush1.msra.mxu0 0.0
      %668 = vmatprep.subr.mxu0 0.0
      %669 = vmatpush1.msra.mxu0 0.0
      %670 = vmatprep.subr.mxu0 0.0
      %671 = vmatpush1.msra.mxu0 0.0
      %672 = vmatprep.subr.mxu0 0.0
      %673 = vmatpush1.msra.mxu0 0.0
      %674 = vmatprep.subr.mxu0 0.0
      %675 = vmatpush1.msra.mxu0 0.0
      %676 = vmatprep.subr.mxu0 0.0
      %677 = vmatpush1.msra.mxu0 0.0
      %678 = vmatprep.subr.mxu0 0.0
      %679 = vmatpush1.msra.mxu0 0.0
      %680 = vmatprep.subr.mxu0 0.0
      %681 = vmatpush1.msra.mxu0 0.0
      %682 = vmatprep.subr.mxu0 0.0
      %683 = vmatpush1.msra.mxu0 0.0
      %684 = vmatprep.subr.mxu0 0.0
      %685 = vmatpush1.msra.mxu0 0.0
      %686 = vmatprep.mubr.f32.mxu0 0.0
      %687 = vmatmul.mubr.f32.gmra.mrb[0].mxu0 %v620
      %v688 = vpop.f32.mrb[0].mxu0
      %v689 = vadd.f32 %v543, %v688
      %v690 = vpop.f32.mrb[0].mxu0
      %691 = vdwg.mxu0
      %v692 = vadd.f32 %v616, %v347
      %v693 = vadd.f32 %v689, %v348
      %vm694 = vcmp.ge.f32.partialorder %v692, 0.0
      %vm695 = vcmp.ge.f32.partialorder %v693, 0.0
      %v696 = vmul.f32 %v692, 0.01
      %v697 = vmul.f32 %v693, 0.01
      %v698 = vsel %vm694, %v692, %v696
      %v699 = vsel %vm695, %v693, %v697
      %700 = vst.msk [vmem:[%s345] sm:$0xff] %vm371, %v698
      %701 = vst.msk [vmem:[%s345 + $0x8] sm:$0xff] %vm371, %v699
      %s702 = smul.u32 2, %s20
      %p703 = scmp.lt.s32.totalorder %s702, 3
      %s704 = scalar_select %p703, %s702, 3
      %p705 = scmp.lt.s32.totalorder %s21, 0
      %s706 = scalar_select %p705, %s21, 0
      %s707 = sadd.s32 %s706, %s704
      %s708 = smul.addr %s707, 8
      %s709 = scalar_lea.vmem %s5, %s708
      // Predicated region
      $region41: #{parallel_res_mlps_forward.6} parent=39 // pred_check
        %p710 = pneg %p180
      $region42: #{parallel_res_mlps_forward.6} parent=39 // pred_check_branch
        %712 = sbr.rel (%p710) target = $region44
      $region43: #{parallel_res_mlps_forward.6} parent=39 // pred_region
        %s713 = smul.u32 2, %s20
      $region44: #{parallel_res_mlps_forward.6} parent=39 // pred_fallthru
        _
    $region40: #{parallel_res_mlps_forward.6} parent=5 // pred_fallthru
      _
    %p714 = scmp.le.s32.totalorder 2, %s11
    // Predicated region
    $region45: #{parallel_res_mlps_forward.6} parent=5 // pred_check
      %p715 = pneg %p714
    $region46: #{parallel_res_mlps_forward.6} parent=5 // pred_check_branch
      %717 = sbr.rel (%p715) target = $region48
    $region47: #{parallel_res_mlps_forward.6} parent=5 // pred_region
      %s718 = ssub.s32 %s11, 2
      // Predicated region
      $region49: #{parallel_res_mlps_forward.6} parent=47 // pred_check
        %p719 = pneg %p186
      $region50: #{parallel_res_mlps_forward.6} parent=47 // pred_check_branch
        %721 = sbr.rel (%p719) target = $region52
      $region51: #{parallel_res_mlps_forward.6} parent=47 // pred_region
        %s722 = smul.u32 2, %s22
        %p723 = scmp.lt.s32.totalorder %s722, 3
        %s724 = scalar_select %p723, %s722, 3
        %p725 = scmp.lt.s32.totalorder %s23, 0
        %s726 = scalar_select %p725, %s23, 0
        %s727 = sadd.s32 %s726, %s724
        %s728 = smul.addr %s727, 8
        %s729 = scalar_lea.vmem %s5, %s728
      $region52: #{parallel_res_mlps_forward.6} parent=47 // pred_fallthru
        _
    $region48: #{parallel_res_mlps_forward.6} parent=5 // pred_fallthru
      _
  $region6: #{parallel_res_mlps_forward.6} parent=0 // loop_footer
    %s15 = sadd.s32 1, %s11
  $region7: #{parallel_res_mlps_forward.6} parent=0 // loop_footer_branch
    %10 = sbr.rel target = $region3
  $region8: #{parallel_res_mlps_forward.6} parent=0 // loop_exit
    _

// kernel: parallel_res_mlps_forward.5
$region0: #{parallel_res_mlps_forward.5}
  #allocation0 [shape = 'u32[]', space=smem, size = 0x4, offset = 0x4, fixed_abs, tag = 'smem constant byte address 0x4 - core index']
  #allocation1 [shape = 'u32[144,128]{1,0:T(1,128)}', space=vmem, size = 0x12000, scoped, tag = 'internal scratch']
  %s0 = inlined_call_operand.vmem [shape: f32[4,8,32], index: 0, kind: input, shape index: {}]
  %s1 = inlined_call_operand.vmem [shape: f32[4,32,32], index: 1, kind: input, shape index: {}]
  %s2 = inlined_call_operand.vmem [shape: f32[4,1,32], index: 2, kind: input, shape index: {}]
  %s3 = inlined_call_operand.hbm [shape: f32[4,32,32], index: 3, kind: input, shape index: {}]
  %s4 = inlined_call_operand.vmem [shape: f32[4,1,32], index: 4, kind: input, shape index: {}]
  %s5 = inlined_call_operand.vmem [shape: f32[4,8,32], index: 5, kind: output, shape index: {}]
  %s6 = sld [smem:[#allocation0]]
  $region57: #{parallel_res_mlps_forward.5} parent=0
    _
  %s8 = ssub.s32 1, %s6
  %s9 = scalar_select 0, %s8, %s6
  $region1: #{parallel_res_mlps_forward.5} parent=0
    #allocation2 [shape = 'u8[65536]{0}', space=vmem, size = 0x10000, scoped, tag = 'input window, operand 3']
    #allocation3 [shape = 's32[2]{0}', space=sflag, size = 0x8, scoped, tag = 'scoped memory for parallel_res_mlps_forward.5']
    %10 = vsyncpa [#allocation3], 0
    %s11 = scalar_lea.sflag [#allocation3], 1
    %12 = vsyncpa %s11, 0
    loop: start=0, step=1, limit=4
    $region2: #{parallel_res_mlps_forward.5} parent=1 // loop_pre_header
      _
    $region3: #{parallel_res_mlps_forward.5} parent=1 // loop_header
      %s14 = sphi 0, %s18
      %p15 = scmp.ge.s32.totalorder %s14, 4
      %s21 = sphi 0, %s33
      %s22 = sphi 0, %s29
      %s23 = sphi 0, %s21
      %s24 = sphi 0, %s22
      %s25 = sphi 0, %s23
      %s26 = sphi 0, %s24
      %s38 = sphi 0, %s40
      %s41 = sphi 0, %s38
      %s42 = sphi 0, %s41
      %s58 = sphi 0, %s42
      %s64 = sphi 0, %s66
      %s67 = sphi 0, %s64
      %s68 = sphi 0, %s67
      %s84 = sphi 0, %s68
      %s90 = sphi 0, %s92
      %s93 = sphi 0, %s90
      %s94 = sphi 0, %s93
      %s110 = sphi 0, %s94
      %s116 = sphi 0, %s118
      %s119 = sphi 0, %s116
      %s120 = sphi 0, %s119
      %s136 = sphi 0, %s120
      %s142 = sphi 0, %s144
      %s145 = sphi 0, %s142
      %s146 = sphi 0, %s145
      %s162 = sphi 0, %s146
      %s170 = sphi 0, %s172
      %s173 = sphi 0, %s170
      %s174 = sphi 0, %s173
      %s190 = sphi 0, %s174
    $region4: #{parallel_res_mlps_forward.5} parent=1 // loop_header_branch
      %17 = sbr.rel (%p15) target = $region8
    $region5: #{parallel_res_mlps_forward.5} parent=1 // loop_body
      %s19 = ssub.s32 %s14, 1
      %s20 = ssub.s32 %s14, 2
      %s27 = sadd.s32 1, %s22
      %p28 = scmp.ge.s32.totalorder %s27, 1
      %s29 = scalar_select %p28, 0, %s27
      %s30 = sadd.s32 1, %s21
      %s31 = scalar_select %p28, %s30, %s21
      %p32 = scmp.ge.s32.totalorder %s31, 2
      %s33 = scalar_select %p32, 0, %s31
      %s34 = ssub.s32 %s21, %s33
      %s35 = ssub.s32 %s22, %s29
      %s36 = sor.u32 %s34, %s35
      %p37 = scmp.eq.s32.totalorder %s36, 0
      %s39 = sadd.s32 %s38, 1
      %s40 = scalar_select %p37, %s38, %s39
      %p43 = pneg %p37
      %p44 = scmp.eq.s32.totalorder %s14, 1
      %p45 = por %p43, %p44
      %p46 = scmp.ne.s32.totalorder %s38, %s41
      %p47 = scmp.eq.s32.totalorder %s14, 0
      %p48 = por %p46, %p47
      %p49 = scmp.ne.s32.totalorder %s38, %s41
      %p50 = scmp.eq.s32.totalorder %s19, 1
      %p51 = por %p49, %p50
      %p52 = scmp.ne.s32.totalorder %s41, %s42
      %p53 = scmp.eq.s32.totalorder %s19, 0
      %p54 = por %p52, %p53
      %p55 = scmp.ne.s32.totalorder %s41, %s42
      %p56 = scmp.eq.s32.totalorder %s20, 1
      %p57 = por %p55, %p56
      %p59 = scmp.ne.s32.totalorder %s42, %s58
      %p60 = scmp.eq.s32.totalorder %s20, 0
      %p61 = por %p59, %p60
      %s62 = ssub.s32 %s21, %s33
      %p63 = scmp.eq.s32.totalorder %s62, 0
      %s65 = sadd.s32 %s64, 1
      %s66 = scalar_select %p63, %s64, %s65
      %p69 = pneg %p63
      %p70 = scmp.eq.s32.totalorder %s14, 1
      %p71 = por %p69, %p70
      %p72 = scmp.ne.s32.totalorder %s64, %s67
      %p73 = scmp.eq.s32.totalorder %s14, 0
      %p74 = por %p72, %p73
      %p75 = scmp.ne.s32.totalorder %s64, %s67
      %p76 = scmp.eq.s32.totalorder %s19, 1
      %p77 = por %p75, %p76
      %p78 = scmp.ne.s32.totalorder %s67, %s68
      %p79 = scmp.eq.s32.totalorder %s19, 0
      %p80 = por %p78, %p79
      %p81 = scmp.ne.s32.totalorder %s67, %s68
      %p82 = scmp.eq.s32.totalorder %s20, 1
      %p83 = por %p81, %p82
      %p85 = scmp.ne.s32.totalorder %s68, %s84
      %p86 = scmp.eq.s32.totalorder %s20, 0
      %p87 = por %p85, %p86
      %s88 = ssub.s32 %s21, %s33
      %p89 = scmp.eq.s32.totalorder %s88, 0
      %s91 = sadd.s32 %s90, 1
      %s92 = scalar_select %p89, %s90, %s91
      %p95 = pneg %p89
      %p96 = scmp.eq.s32.totalorder %s14, 1
      %p97 = por %p95, %p96
      %p98 = scmp.ne.s32.totalorder %s90, %s93
      %p99 = scmp.eq.s32.totalorder %s14, 0
      %p100 = por %p98, %p99
      %p101 = scmp.ne.s32.totalorder %s90, %s93
      %p102 = scmp.eq.s32.totalorder %s19, 1
      %p103 = por %p101, %p102
      %p104 = scmp.ne.s32.totalorder %s93, %s94
      %p105 = scmp.eq.s32.totalorder %s19, 0
      %p106 = por %p104, %p105
      %p107 = scmp.ne.s32.totalorder %s93, %s94
      %p108 = scmp.eq.s32.totalorder %s20, 1
      %p109 = por %p107, %p108
      %p111 = scmp.ne.s32.totalorder %s94, %s110
      %p112 = scmp.eq.s32.totalorder %s20, 0
      %p113 = por %p111, %p112
      %s114 = ssub.s32 %s21, %s33
      %p115 = scmp.eq.s32.totalorder %s114, 0
      %s117 = sadd.s32 %s116, 1
      %s118 = scalar_select %p115, %s116, %s117
      %p121 = pneg %p115
      %p122 = scmp.eq.s32.totalorder %s14, 1
      %p123 = por %p121, %p122
      %p124 = scmp.ne.s32.totalorder %s116, %s119
      %p125 = scmp.eq.s32.totalorder %s14, 0
      %p126 = por %p124, %p125
      %p127 = scmp.ne.s32.totalorder %s116, %s119
      %p128 = scmp.eq.s32.totalorder %s19, 1
      %p129 = por %p127, %p128
      %p130 = scmp.ne.s32.totalorder %s119, %s120
      %p131 = scmp.eq.s32.totalorder %s19, 0
      %p132 = por %p130, %p131
      %p133 = scmp.ne.s32.totalorder %s119, %s120
      %p134 = scmp.eq.s32.totalorder %s20, 1
      %p135 = por %p133, %p134
      %p137 = scmp.ne.s32.totalorder %s120, %s136
      %p138 = scmp.eq.s32.totalorder %s20, 0
      %p139 = por %p137, %p138
      %s140 = ssub.s32 %s21, %s33
      %p141 = scmp.eq.s32.totalorder %s140, 0
      %s143 = sadd.s32 %s142, 1
      %s144 = scalar_select %p141, %s142, %s143
      %p147 = pneg %p141
      %p148 = scmp.eq.s32.totalorder %s14, 1
      %p149 = por %p147, %p148
      %p150 = scmp.ne.s32.totalorder %s142, %s145
      %p151 = scmp.eq.s32.totalorder %s14, 0
      %p152 = por %p150, %p151
      %p153 = scmp.ne.s32.totalorder %s142, %s145
      %p154 = scmp.eq.s32.totalorder %s19, 1
      %p155 = por %p153, %p154
      %p156 = scmp.ne.s32.totalorder %s145, %s146
      %p157 = scmp.eq.s32.totalorder %s19, 0
      %p158 = por %p156, %p157
      %p159 = scmp.ne.s32.totalorder %s145, %s146
      %p160 = scmp.eq.s32.totalorder %s20, 1
      %p161 = por %p159, %p160
      %p163 = scmp.ne.s32.totalorder %s146, %s162
      %p164 = scmp.eq.s32.totalorder %s20, 0
      %p165 = por %p163, %p164
      %s166 = ssub.s32 %s21, %s33
      %s167 = ssub.s32 %s22, %s29
      %s168 = sor.u32 %s166, %s167
      %p169 = scmp.eq.s32.totalorder %s168, 0
      %s171 = sadd.s32 %s170, 1
      %s172 = scalar_select %p169, %s170, %s171
      %p175 = pneg %p169
      %p176 = scmp.eq.s32.totalorder %s14, 1
      %p177 = por %p175, %p176
      %p178 = scmp.ne.s32.totalorder %s170, %s173
      %p179 = scmp.eq.s32.totalorder %s14, 0
      %p180 = por %p178, %p179
      %p181 = scmp.ne.s32.totalorder %s170, %s173
      %p182 = scmp.eq.s32.totalorder %s19, 1
      %p183 = por %p181, %p182
      %p184 = scmp.ne.s32.totalorder %s173, %s174
      %p185 = scmp.eq.s32.totalorder %s19, 0
      %p186 = por %p184, %p185
      %p187 = scmp.ne.s32.totalorder %s173, %s174
      %p188 = scmp.eq.s32.totalorder %s20, 1
      %p189 = por %p187, %p188
      %p191 = scmp.ne.s32.totalorder %s174, %s190
      %p192 = scmp.eq.s32.totalorder %s20, 0
      %p193 = por %p191, %p192
      %p194 = scmp.le.s32.totalorder 1, %s14
      %p195 = scmp.lt.s32.totalorder %s14, 3
      %p196 = pnand %p194, %p195
      %p197 = pneg %p196
      // Predicated region
      $region9: #{parallel_res_mlps_forward.5} parent=5 // pred_check
        _
      $region10: #{parallel_res_mlps_forward.5} parent=5 // pred_check_branch
        %199 = sbr.rel (%p196) target = $region12
      $region11: #{parallel_res_mlps_forward.5} parent=5 // pred_region
        %s200 = ssub.s32 %s14, 1
      $region12: #{parallel_res_mlps_forward.5} parent=5 // pred_fallthru
        _
      %p201 = scmp.lt.s32.totalorder %s14, 2
      // Predicated region
      $region13: #{parallel_res_mlps_forward.5} parent=5 // pred_check
        %p202 = pneg %p201
      $region14: #{parallel_res_mlps_forward.5} parent=5 // pred_check_branch
        %204 = sbr.rel (%p202) target = $region16
      $region15: #{parallel_res_mlps_forward.5} parent=5 // pred_region
        // Predicated region
        $region17: #{parallel_res_mlps_forward.5} parent=15 // pred_check
          %p205 = pneg %p48
        $region18: #{parallel_res_mlps_forward.5} parent=15 // pred_check_branch
          %207 = sbr.rel (%p205) target = $region20
        $region19: #{parallel_res_mlps_forward.5} parent=15 // pred_region
          %s208 = smul.u32 2, %s21
          %p209 = scmp.lt.s32.totalorder %s208, 3
          %s210 = scalar_select %p209, %s208, 3
          %p211 = scmp.lt.s32.totalorder %s22, 0
          %s212 = scalar_select %p211, %s22, 0
          %s213 = sadd.s32 %s212, %s210
          %s214 = smul.addr %s213, 8
          %s215 = scalar_lea.vmem %s0, %s214
          %s216 = smul.u32 2, %s21
        $region20: #{parallel_res_mlps_forward.5} parent=15 // pred_fallthru
          _
        // Predicated region
        $region21: #{parallel_res_mlps_forward.5} parent=15 // pred_check
          %p217 = pneg %p74
        $region22: #{parallel_res_mlps_forward.5} parent=15 // pred_check_branch
          %219 = sbr.rel (%p217) target = $region24
        $region23: #{parallel_res_mlps_forward.5} parent=15 // pred_region
          %s220 = smul.u32 2, %s21
          %p221 = scmp.lt.s32.totalorder %s220, 3
          %s222 = scalar_select %p221, %s220, 3
          %s223 = smul.addr %s222, 4
          %s224 = smul.addr %s223, 8
          %s225 = scalar_lea.vmem %s1, %s224
          %s226 = smul.u32 2, %s21
        $region24: #{parallel_res_mlps_forward.5} parent=15 // pred_fallthru
          _
        // Predicated region
        $region25: #{parallel_res_mlps_forward.5} parent=15 // pred_check
          %p227 = pneg %p100
        $region26: #{parallel_res_mlps_forward.5} parent=15 // pred_check_branch
          %229 = sbr.rel (%p227) target = $region28
        $region27: #{parallel_res_mlps_forward.5} parent=15 // pred_region
          %s230 = smul.u32 2, %s21
          %p231 = scmp.lt.s32.totalorder %s230, 3
          %s232 = scalar_select %p231, %s230, 3
          %s233 = scalar_lea.vmem %s2, %s232
          %s234 = smul.u32 2, %s21
        $region28: #{parallel_res_mlps_forward.5} parent=15 // pred_fallthru
          _
        // Predicated region
        $region29: #{parallel_res_mlps_forward.5} parent=15 // pred_check
          %p235 = pneg %p126
        $region30: #{parallel_res_mlps_forward.5} parent=15 // pred_check_branch
          %237 = sbr.rel (%p235) target = $region32
        $region31: #{parallel_res_mlps_forward.5} parent=15 // pred_region
          %s238 = sand.u32 %s116, 1
          %s239 = scalar_lea.sflag [#allocation3], %s238
          %s240 = sand.u32 %s116, 1
          %s241 = smul.addr %s240, 64
          %s242 = scalar_lea.vmem [#allocation2], %s241
          %s243 = smul.u32 2, %s21
          %s245 = ssub.s32 1024, 1024
          %246 = vsyncadd %s239, %s245
          %s247 = smul.addr %s243, 4
          %s248 = smul.addr %s247, 128
          %s249 = scalar_lea.hbm %s3, %s248
          %s250 = sshll.u32 %s242, 4
          %s251 = int_to_ptr.vmem [resolvable:$true] %s250
          %256 = dma.hbm_to_vmem [thread:$0]  %s249, 1024, %s251, %s239, 128, 128, 8
        $region32: #{parallel_res_mlps_forward.5} parent=15 // pred_fallthru
          _
        // Predicated region
        $region33: #{parallel_res_mlps_forward.5} parent=15 // pred_check
          %p257 = pneg %p152
        $region34: #{parallel_res_mlps_forward.5} parent=15 // pred_check_branch
          %259 = sbr.rel (%p257) target = $region36
        $region35: #{parallel_res_mlps_forward.5} parent=15 // pred_region
          %s260 = smul.u32 2, %s21
          %p261 = scmp.lt.s32.totalorder %s260, 3
          %s262 = scalar_select %p261, %s260, 3
          %s263 = scalar_lea.vmem %s4, %s262
          %s264 = smul.u32 2, %s21
        $region36: #{parallel_res_mlps_forward.5} parent=15 // pred_fallthru
          _
      $region16: #{parallel_res_mlps_forward.5} parent=5 // pred_fallthru
        _
      %p265 = scmp.le.s32.totalorder 1, %s14
      %p266 = scmp.lt.s32.totalorder %s14, 3
      %p267 = pnand %p265, %p266
      %p268 = pneg %p267
      // Predicated region
      $region37: #{parallel_res_mlps_forward.5} parent=5 // pred_check
        _
      $region38: #{parallel_res_mlps_forward.5} parent=5 // pred_check_branch
        %270 = sbr.rel (%p267) target = $region40
      $region39: #{parallel_res_mlps_forward.5} parent=5 // pred_region
        %s271 = ssub.s32 %s14, 1
        %s272 = sand.u32 %s119, 1
        %s273 = scalar_lea.sflag [#allocation3], %s272
        %s274 = sand.u32 %s119, 1
        %s275 = smul.addr %s274, 64
        %s276 = scalar_lea.vmem [#allocation2], %s275
        // Predicated region
        $region41: #{parallel_res_mlps_forward.5} parent=39 // pred_check
          %p277 = pneg %p132
        $region42: #{parallel_res_mlps_forward.5} parent=39 // pred_check_branch
          %279 = sbr.rel (%p277) target = $region44
        $region43: #{parallel_res_mlps_forward.5} parent=39 // pred_region
          %280 = dma.done %s273, 1024
        $region44: #{parallel_res_mlps_forward.5} parent=39 // pred_fallthru
          _
        %s281 = smul.u32 2, %s23
        %p282 = scmp.lt.s32.totalorder %s281, 3
        %s283 = scalar_select %p282, %s281, 3
        %p284 = scmp.lt.s32.totalorder %s24, 0
        %s285 = scalar_select %p284, %s24, 0
        %s286 = sadd.s32 %s285, %s283
        %s287 = smul.addr %s286, 8
        %s288 = scalar_lea.vmem %s0, %s287
        %p289 = pneg %p54
        %p290 = pneg %p51
        %s291 = smul.u32 2, %s23
        %p292 = scmp.lt.s32.totalorder %s291, 3
        %s293 = scalar_select %p292, %s291, 3
        %s294 = smul.addr %s293, 4
        %s295 = smul.addr %s294, 8
        %s296 = scalar_lea.vmem %s1, %s295
        %p297 = pneg %p80
        %p298 = pneg %p77
        %s299 = smul.u32 2, %s23
        %p300 = scmp.lt.s32.totalorder %s299, 3
        %s301 = scalar_select %p300, %s299, 3
        %s302 = scalar_lea.vmem %s2, %s301
        %p303 = pneg %p106
        %p304 = pneg %p103
        %s305 = sand.u32 %s119, 1
        %s306 = scalar_lea.sflag [#allocation3], %s305
        %s307 = sand.u32 %s119, 1
        %s308 = smul.addr %s307, 64
        %s309 = scalar_lea.vmem [#allocation2], %s308
        %p310 = pneg %p132
        %p311 = pneg %p129
        %s312 = smul.u32 2, %s23
        %p313 = scmp.lt.s32.totalorder %s312, 3
        %s314 = scalar_select %p313, %s312, 3
        %s315 = scalar_lea.vmem %s4, %s314
        %p316 = pneg %p158
        %p317 = pneg %p155
        %p318 = pneg %p186
        %p319 = pneg %p183
        %s320 = smul.u32 2, %s23
        %p321 = scmp.lt.s32.totalorder %s320, 3
        %s322 = scalar_select %p321, %s320, 3
        %p323 = scmp.lt.s32.totalorder %s24, 0
        %s324 = scalar_select %p323, %s24, 0
        %s325 = sadd.s32 %s324, %s322
        %s326 = smul.addr %s325, 8
        %s327 = scalar_lea.vmem %s5, %s326
        %s328 = smul.u32 2, %s23
        %p329 = scmp.lt.s32.totalorder %s328, 3
        %s330 = scalar_select %p329, %s328, 3
        %p331 = scmp.lt.s32.totalorder %s24, 0
        %s332 = scalar_select %p331, %s24, 0
        %s333 = sadd.s32 %s332, %s330
        %s334 = smul.addr %s333, 8
        %s335 = scalar_lea.vmem %s0, %s334
        %s336 = smul.u32 2, %s23
        %s337 = smul.u32 2, %s23
        %p338 = scmp.lt.s32.totalorder %s337, 3
        %s339 = scalar_select %p338, %s337, 3
        %s340 = smul.addr %s339, 4
        %s341 = smul.addr %s340, 8
        %s342 = scalar_lea.vmem %s1, %s341
        %s343 = smul.u32 2, %s23
        %s344 = smul.u32 2, %s23
        %p345 = scmp.lt.s32.totalorder %s344, 3
        %s346 = scalar_select %p345, %s344, 3
        %s347 = scalar_lea.vmem %s2, %s346
        %s348 = smul.u32 2, %s23
        %s349 = smul.u32 2, %s23
        %s350 = smul.u32 2, %s23
        %p351 = scmp.lt.s32.totalorder %s350, 3
        %s352 = scalar_select %p351, %s350, 3
        %s353 = scalar_lea.vmem %s4, %s352
        %s354 = smul.u32 2, %s23
        %s355 = smul.u32 2, %s23
        %p356 = scmp.lt.s32.totalorder %s355, 3
        %s357 = scalar_select %p356, %s355, 3
        %p358 = scmp.lt.s32.totalorder %s24, 0
        %s359 = scalar_select %p358, %s24, 0
        %s360 = sadd.s32 %s359, %s357
        %s361 = smul.addr %s360, 8
        %s362 = scalar_lea.vmem %s5, %s361
        %s363 = smul.u32 2, %s23
        %v364 = vld [vmem:[%s335] sm:$0xff]
        %v365 = vld [vmem:[%s335 + $0x8] sm:$0xff]
        %v366 = vld [vmem:[%s342] sm:$0xff]
        %v367 = vld [vmem:[%s342 + $0x8] sm:$0xff]
        %v368 = vld [vmem:[%s342 + $0x10] sm:$0xff]
        %v369 = vld [vmem:[%s342 + $0x18] sm:$0xff]
        %v370 = vld [vmem:[%s342 + $0x20] sm:$0xff]
        %v371 = vld [vmem:[%s342 + $0x28] sm:$0xff]
        %v372 = vld [vmem:[%s342 + $0x30] sm:$0xff]
        %v373 = vld [vmem:[%s342 + $0x38] sm:$0xff]
        %v374 = vld [vmem:[%s347] sm:$0x1]
        %v375 = vld [vmem:[%s347 + $0x1] sm:$0x1]
        %v378 = vlaneseq
        %v379 = vshrl.u32 %v378, 7
        %v380 = vsub.s32 0, %v379
        %v381 = vrot.slane %v374, %v380
        %v382 = vlaneseq
        %v383 = vshrl.u32 %v382, 7
        %v384 = vsub.s32 0, %v383
        %v385 = vrot.slane %v375, %v384
        %vm388 = vcmask 261120
        %v390 = vsel %vm388, %v364, 0
        %392 = vmatprep.subr.mxu0 0.0
        %393 = vmatpush1.msra.mxu0 %v366
        %394 = vmatprep.subr.mxu0 0.0
        %395 = vmatpush1.msra.mxu0 %v367
        %396 = vmatprep.subr.mxu0 0.0
        %397 = vmatpush1.msra.mxu0 %v368
        %398 = vmatprep.subr.mxu0 0.0
        %399 = vmatpush1.msra.mxu0 %v369
        %400 = vmatprep.subr.mxu0 0.0
        %401 = vmatpush1.msra.mxu0 0.0
        %402 = vmatprep.subr.mxu0 0.0
        %403 = vmatpush1.msra.mxu0 0.0
        %404 = vmatprep.subr.mxu0 0.0
        %405 = vmatpush1.msra.mxu0 0.0
        %406 = vmatprep.subr.mxu0 0.0
        %407 = vmatpush1.msra.mxu0 0.0
        %408 = vmatprep.subr.mxu0 0.0
        %409 = vmatpush1.msra.mxu0 0.0
        %410 = vmatprep.subr.mxu0 0.0
        %411 = vmatpush1.msra.mxu0 0.0
        %412 = vmatprep.subr.mxu0 0.0
        %413 = vmatpush1.msra.mxu0 0.0
        %414 = vmatprep.subr.mxu0 0.0
        %415 = vmatpush1.msra.mxu0 0.0
        %416 = vmatprep.subr.mxu0 0.0
        %417 = vmatpush1.msra.mxu0 0.0
        %418 = vmatprep.subr.mxu0 0.0
        %419 = vmatpush1.msra.mxu0 0.0
        %420 = vmatprep.subr.mxu0 0.0
        %421 = vmatpush1.msra.mxu0 0.0
        %422 = vmatprep.subr.mxu0 0.0
        %423 = vmatpush1.msra.mxu0 0.0
        %424 = vmatprep.subr.mxu0 0.0
        %425 = vmatpush1.msra.mxu0 0.0
        %426 = vmatprep.subr.mxu0 0.0
        %427 = vmatpush1.msra.mxu0 0.0
        %428 = vmatprep.subr.mxu0 0.0
        %429 = vmatpush1.msra.mxu0 0.0
        %430 = vmatprep.subr.mxu0 0.0
        %431 = vmatpush1.msra.mxu0 0.0
        %432 = vmatprep.subr.mxu0 0.0
        %433 = vmatpush1.msra.mxu0 0.0
        %434 = vmatprep.subr.mxu0 0.0
        %435 = vmatpush1.msra.mxu0 0.0
        %436 = vmatprep.subr.mxu0 0.0
        %437 = vmatpush1.msra.mxu0 0.0
        %438 = vmatprep.subr.mxu0 0.0
        %439 = vmatpush1.msra.mxu0 0.0
        %440 = vmatprep.subr.mxu0 0.0
        %441 = vmatpush1.msra.mxu0 0.0
        %442 = vmatprep.subr.mxu0 0.0
        %443 = vmatpush1.msra.mxu0 0.0
        %444 = vmatprep.subr.mxu0 0.0
        %445 = vmatpush1.msra.mxu0 0.0
        %446 = vmatprep.subr.mxu0 0.0
        %447 = vmatpush1.msra.mxu0 0.0
        %448 = vmatprep.subr.mxu0 0.0
        %449 = vmatpush1.msra.mxu0 0.0
        %450 = vmatprep.subr.mxu0 0.0
        %451 = vmatpush1.msra.mxu0 0.0
        %452 = vmatprep.subr.mxu0 0.0
        %453 = vmatpush1.msra.mxu0 0.0
        %454 = vmatprep.subr.mxu0 0.0
        %455 = vmatpush1.msra.mxu0 0.0
        %456 = vmatprep.mubr.f32.mxu0 0.0
        %457 = vmatmul.mubr.f32.gmra.mrb[0].mxu0 %v390
        %v458 = vpop.f32.mrb[0].mxu0
        %v459 = vadd.f32 %v381, %v458
        %v460 = vpop.f32.mrb[0].mxu0
        %461 = vdwg.mxu0
        %v463 = vsel %vm388, %v365, 0
        %465 = vmatprep.subr.mxu0 0.0
        %466 = vmatpush1.msra.mxu0 %v370
        %467 = vmatprep.subr.mxu0 0.0
        %468 = vmatpush1.msra.mxu0 %v371
        %469 = vmatprep.subr.mxu0 0.0
        %470 = vmatpush1.msra.mxu0 %v372
        %471 = vmatprep.subr.mxu0 0.0
        %472 = vmatpush1.msra.mxu0 %v373
        %473 = vmatprep.subr.mxu0 0.0
        %474 = vmatpush1.msra.mxu0 0.0
        %475 = vmatprep.subr.mxu0 0.0
        %476 = vmatpush1.msra.mxu0 0.0
        %477 = vmatprep.subr.mxu0 0.0
        %478 = vmatpush1.msra.mxu0 0.0
        %479 = vmatprep.subr.mxu0 0.0
        %480 = vmatpush1.msra.mxu0 0.0
        %481 = vmatprep.subr.mxu0 0.0
        %482 = vmatpush1.msra.mxu0 0.0
        %483 = vmatprep.subr.mxu0 0.0
        %484 = vmatpush1.msra.mxu0 0.0
        %485 = vmatprep.subr.mxu0 0.0
        %486 = vmatpush1.msra.mxu0 0.0
        %487 = vmatprep.subr.mxu0 0.0
        %488 = vmatpush1.msra.mxu0 0.0
        %489 = vmatprep.subr.mxu0 0.0
        %490 = vmatpush1.msra.mxu0 0.0
        %491 = vmatprep.subr.mxu0 0.0
        %492 = vmatpush1.msra.mxu0 0.0
        %493 = vmatprep.subr.mxu0 0.0
        %494 = vmatpush1.msra.mxu0 0.0
        %495 = vmatprep.subr.mxu0 0.0
        %496 = vmatpush1.msra.mxu0 0.0
        %497 = vmatprep.subr.mxu0 0.0
        %498 = vmatpush1.msra.mxu0 0.0
        %499 = vmatprep.subr.mxu0 0.0
        %500 = vmatpush1.msra.mxu0 0.0
        %501 = vmatprep.subr.mxu0 0.0
        %502 = vmatpush1.msra.mxu0 0.0
        %503 = vmatprep.subr.mxu0 0.0
        %504 = vmatpush1.msra.mxu0 0.0
        %505 = vmatprep.subr.mxu0 0.0
        %506 = vmatpush1.msra.mxu0 0.0
        %507 = vmatprep.subr.mxu0 0.0
        %508 = vmatpush1.msra.mxu0 0.0
        %509 = vmatprep.subr.mxu0 0.0
        %510 = vmatpush1.msra.mxu0 0.0
        %511 = vmatprep.subr.mxu0 0.0
        %512 = vmatpush1.msra.mxu0 0.0
        %513 = vmatprep.subr.mxu0 0.0
        %514 = vmatpush1.msra.mxu0 0.0
        %515 = vmatprep.subr.mxu0 0.0
        %516 = vmatpush1.msra.mxu0 0.0
        %517 = vmatprep.subr.mxu0 0.0
        %518 = vmatpush1.msra.mxu0 0.0
        %519 = vmatprep.subr.mxu0 0.0
        %520 = vmatpush1.msra.mxu0 0.0
        %521 = vmatprep.subr.mxu0 0.0
        %522 = vmatpush1.msra.mxu0 0.0
        %523 = vmatprep.subr.mxu0 0.0
        %524 = vmatpush1.msra.mxu0 0.0
        %525 = vmatprep.subr.mxu0 0.0
        %526 = vmatpush1.msra.mxu0 0.0
        %527 = vmatprep.subr.mxu0 0.0
        %528 = vmatpush1.msra.mxu0 0.0
        %529 = vmatprep.mubr.f32.mxu0 0.0
        %530 = vmatmul.mubr.f32.gmra.mrb[0].mxu0 %v463
        %v531 = vpop.f32.mrb[0].mxu0
        %v532 = vadd.f32 %v385, %v531
        %v533 = vpop.f32.mrb[0].mxu0
        %534 = vdwg.mxu0
        %vm535 = vcmp.ge.f32.partialorder %v459, 0.0
        %vm536 = vcmp.ge.f32.partialorder %v532, 0.0
        %v537 = vmul.f32 %v459, 0.01
        %v538 = vmul.f32 %v532, 0.01
        %v539 = vsel %vm535, %v459, %v537
        %v540 = vsel %vm536, %v532, %v538
        %v541 = vld [vmem:[%s276] sm:$0xff]
        %v542 = vld [vmem:[%s276 + $0x8] sm:$0xff]
        %v543 = vld [vmem:[%s276 + $0x10] sm:$0xff]
        %v544 = vld [vmem:[%s276 + $0x18] sm:$0xff]
        %v545 = vld [vmem:[%s276 + $0x20] sm:$0xff]
        %v546 = vld [vmem:[%s276 + $0x28] sm:$0xff]
        %v547 = vld [vmem:[%s276 + $0x30] sm:$0xff]
        %v548 = vld [vmem:[%s276 + $0x38] sm:$0xff]
        %v549 = vld [vmem:[%s353] sm:$0x1]
        %v550 = vld [vmem:[%s353 + $0x1] sm:$0x1]
        %v553 = vlaneseq
        %v554 = vshrl.u32 %v553, 7
        %v555 = vsub.s32 0, %v554
        %v556 = vrot.slane %v549, %v555
        %v557 = vlaneseq
        %v558 = vshrl.u32 %v557, 7
        %v559 = vsub.s32 0, %v558
        %v560 = vrot.slane %v550, %v559
        %v564 = vsel %vm388, %v539, 0
        %566 = vmatprep.subr.mxu0 0.0
        %567 = vmatpush1.msra.mxu0 %v541
        %568 = vmatprep.subr.mxu0 0.0
        %569 = vmatpush1.msra.mxu0 %v542
        %570 = vmatprep.subr.mxu0 0.0
        %571 = vmatpush1.msra.mxu0 %v543
        %572 = vmatprep.subr.mxu0 0.0
        %573 = vmatpush1.msra.mxu0 %v544
        %574 = vmatprep.subr.mxu0 0.0
        %575 = vmatpush1.msra.mxu0 0.0
        %576 = vmatprep.subr.mxu0 0.0
        %577 = vmatpush1.msra.mxu0 0.0
        %578 = vmatprep.subr.mxu0 0.0
        %579 = vmatpush1.msra.mxu0 0.0
        %580 = vmatprep.subr.mxu0 0.0
        %581 = vmatpush1.msra.mxu0 0.0
        %582 = vmatprep.subr.mxu0 0.0
        %583 = vmatpush1.msra.mxu0 0.0
        %584 = vmatprep.subr.mxu0 0.0
        %585 = vmatpush1.msra.mxu0 0.0
        %586 = vmatprep.subr.mxu0 0.0
        %587 = vmatpush1.msra.mxu0 0.0
        %588 = vmatprep.subr.mxu0 0.0
        %589 = vmatpush1.msra.mxu0 0.0
        %590 = vmatprep.subr.mxu0 0.0
        %591 = vmatpush1.msra.mxu0 0.0
        %592 = vmatprep.subr.mxu0 0.0
        %593 = vmatpush1.msra.mxu0 0.0
        %594 = vmatprep.subr.mxu0 0.0
        %595 = vmatpush1.msra.mxu0 0.0
        %596 = vmatprep.subr.mxu0 0.0
        %597 = vmatpush1.msra.mxu0 0.0
        %598 = vmatprep.subr.mxu0 0.0
        %599 = vmatpush1.msra.mxu0 0.0
        %600 = vmatprep.subr.mxu0 0.0
        %601 = vmatpush1.msra.mxu0 0.0
        %602 = vmatprep.subr.mxu0 0.0
        %603 = vmatpush1.msra.mxu0 0.0
        %604 = vmatprep.subr.mxu0 0.0
        %605 = vmatpush1.msra.mxu0 0.0
        %606 = vmatprep.subr.mxu0 0.0
        %607 = vmatpush1.msra.mxu0 0.0
        %608 = vmatprep.subr.mxu0 0.0
        %609 = vmatpush1.msra.mxu0 0.0
        %610 = vmatprep.subr.mxu0 0.0
        %611 = vmatpush1.msra.mxu0 0.0
        %612 = vmatprep.subr.mxu0 0.0
        %613 = vmatpush1.msra.mxu0 0.0
        %614 = vmatprep.subr.mxu0 0.0
        %615 = vmatpush1.msra.mxu0 0.0
        %616 = vmatprep.subr.mxu0 0.0
        %617 = vmatpush1.msra.mxu0 0.0
        %618 = vmatprep.subr.mxu0 0.0
        %619 = vmatpush1.msra.mxu0 0.0
        %620 = vmatprep.subr.mxu0 0.0
        %621 = vmatpush1.msra.mxu0 0.0
        %622 = vmatprep.subr.mxu0 0.0
        %623 = vmatpush1.msra.mxu0 0.0
        %624 = vmatprep.subr.mxu0 0.0
        %625 = vmatpush1.msra.mxu0 0.0
        %626 = vmatprep.subr.mxu0 0.0
        %627 = vmatpush1.msra.mxu0 0.0
        %628 = vmatprep.subr.mxu0 0.0
        %629 = vmatpush1.msra.mxu0 0.0
        %630 = vmatprep.mubr.f32.mxu0 0.0
        %631 = vmatmul.mubr.f32.gmra.mrb[0].mxu0 %v564
        %v632 = vpop.f32.mrb[0].mxu0
        %v633 = vadd.f32 %v556, %v632
        %v634 = vpop.f32.mrb[0].mxu0
        %635 = vdwg.mxu0
        %v637 = vsel %vm388, %v540, 0
        %639 = vmatprep.subr.mxu0 0.0
        %640 = vmatpush1.msra.mxu0 %v545
        %641 = vmatprep.subr.mxu0 0.0
        %642 = vmatpush1.msra.mxu0 %v546
        %643 = vmatprep.subr.mxu0 0.0
        %644 = vmatpush1.msra.mxu0 %v547
        %645 = vmatprep.subr.mxu0 0.0
        %646 = vmatpush1.msra.mxu0 %v548
        %647 = vmatprep.subr.mxu0 0.0
        %648 = vmatpush1.msra.mxu0 0.0
        %649 = vmatprep.subr.mxu0 0.0
        %650 = vmatpush1.msra.mxu0 0.0
        %651 = vmatprep.subr.mxu0 0.0
        %652 = vmatpush1.msra.mxu0 0.0
        %653 = vmatprep.subr.mxu0 0.0
        %654 = vmatpush1.msra.mxu0 0.0
        %655 = vmatprep.subr.mxu0 0.0
        %656 = vmatpush1.msra.mxu0 0.0
        %657 = vmatprep.subr.mxu0 0.0
        %658 = vmatpush1.msra.mxu0 0.0
        %659 = vmatprep.subr.mxu0 0.0
        %660 = vmatpush1.msra.mxu0 0.0
        %661 = vmatprep.subr.mxu0 0.0
        %662 = vmatpush1.msra.mxu0 0.0
        %663 = vmatprep.subr.mxu0 0.0
        %664 = vmatpush1.msra.mxu0 0.0
        %665 = vmatprep.subr.mxu0 0.0
        %666 = vmatpush1.msra.mxu0 0.0
        %667 = vmatprep.subr.mxu0 0.0
        %668 = vmatpush1.msra.mxu0 0.0
        %669 = vmatprep.subr.mxu0 0.0
        %670 = vmatpush1.msra.mxu0 0.0
        %671 = vmatprep.subr.mxu0 0.0
        %672 = vmatpush1.msra.mxu0 0.0
        %673 = vmatprep.subr.mxu0 0.0
        %674 = vmatpush1.msra.mxu0 0.0
        %675 = vmatprep.subr.mxu0 0.0
        %676 = vmatpush1.msra.mxu0 0.0
        %677 = vmatprep.subr.mxu0 0.0
        %678 = vmatpush1.msra.mxu0 0.0
        %679 = vmatprep.subr.mxu0 0.0
        %680 = vmatpush1.msra.mxu0 0.0
        %681 = vmatprep.subr.mxu0 0.0
        %682 = vmatpush1.msra.mxu0 0.0
        %683 = vmatprep.subr.mxu0 0.0
        %684 = vmatpush1.msra.mxu0 0.0
        %685 = vmatprep.subr.mxu0 0.0
        %686 = vmatpush1.msra.mxu0 0.0
        %687 = vmatprep.subr.mxu0 0.0
        %688 = vmatpush1.msra.mxu0 0.0
        %689 = vmatprep.subr.mxu0 0.0
        %690 = vmatpush1.msra.mxu0 0.0
        %691 = vmatprep.subr.mxu0 0.0
        %692 = vmatpush1.msra.mxu0 0.0
        %693 = vmatprep.subr.mxu0 0.0
        %694 = vmatpush1.msra.mxu0 0.0
        %695 = vmatprep.subr.mxu0 0.0
        %696 = vmatpush1.msra.mxu0 0.0
        %697 = vmatprep.subr.mxu0 0.0
        %698 = vmatpush1.msra.mxu0 0.0
        %699 = vmatprep.subr.mxu0 0.0
        %700 = vmatpush1.msra.mxu0 0.0
        %701 = vmatprep.subr.mxu0 0.0
        %702 = vmatpush1.msra.mxu0 0.0
        %703 = vmatprep.mubr.f32.mxu0 0.0
        %704 = vmatmul.mubr.f32.gmra.mrb[0].mxu0 %v637
        %v705 = vpop.f32.mrb[0].mxu0
        %v706 = vadd.f32 %v560, %v705
        %v707 = vpop.f32.mrb[0].mxu0
        %708 = vdwg.mxu0
        %v709 = vadd.f32 %v633, %v364
        %v710 = vadd.f32 %v706, %v365
        %vm711 = vcmp.ge.f32.partialorder %v709, 0.0
        %vm712 = vcmp.ge.f32.partialorder %v710, 0.0
        %v713 = vmul.f32 %v709, 0.01
        %v714 = vmul.f32 %v710, 0.01
        %v715 = vsel %vm711, %v709, %v713
        %v716 = vsel %vm712, %v710, %v714
        %717 = vst.msk [vmem:[%s362] sm:$0xff] %vm388, %v715
        %718 = vst.msk [vmem:[%s362 + $0x8] sm:$0xff] %vm388, %v716
        %s719 = smul.u32 2, %s23
        %p720 = scmp.lt.s32.totalorder %s719, 3
        %s721 = scalar_select %p720, %s719, 3
        %p722 = scmp.lt.s32.totalorder %s24, 0
        %s723 = scalar_select %p722, %s24, 0
        %s724 = sadd.s32 %s723, %s721
        %s725 = smul.addr %s724, 8
        %s726 = scalar_lea.vmem %s5, %s725
        // Predicated region
        $region45: #{parallel_res_mlps_forward.5} parent=39 // pred_check
          %p727 = pneg %p183
        $region46: #{parallel_res_mlps_forward.5} parent=39 // pred_check_branch
          %729 = sbr.rel (%p727) target = $region48
        $region47: #{parallel_res_mlps_forward.5} parent=39 // pred_region
          %s730 = smul.u32 2, %s23
        $region48: #{parallel_res_mlps_forward.5} parent=39 // pred_fallthru
          _
      $region40: #{parallel_res_mlps_forward.5} parent=5 // pred_fallthru
        _
      %p731 = scmp.le.s32.totalorder 2, %s14
      // Predicated region
      $region49: #{parallel_res_mlps_forward.5} parent=5 // pred_check
        %p732 = pneg %p731
      $region50: #{parallel_res_mlps_forward.5} parent=5 // pred_check_branch
        %734 = sbr.rel (%p732) target = $region52
      $region51: #{parallel_res_mlps_forward.5} parent=5 // pred_region
        %s735 = ssub.s32 %s14, 2
        // Predicated region
        $region53: #{parallel_res_mlps_forward.5} parent=51 // pred_check
          %p736 = pneg %p189
        $region54: #{parallel_res_mlps_forward.5} parent=51 // pred_check_branch
          %738 = sbr.rel (%p736) target = $region56
        $region55: #{parallel_res_mlps_forward.5} parent=51 // pred_region
          %s739 = smul.u32 2, %s25
          %p740 = scmp.lt.s32.totalorder %s739, 3
          %s741 = scalar_select %p740, %s739, 3
          %p742 = scmp.lt.s32.totalorder %s26, 0
          %s743 = scalar_select %p742, %s26, 0
          %s744 = sadd.s32 %s743, %s741
          %s745 = smul.addr %s744, 8
          %s746 = scalar_lea.vmem %s5, %s745
        $region56: #{parallel_res_mlps_forward.5} parent=51 // pred_fallthru
          _
      $region52: #{parallel_res_mlps_forward.5} parent=5 // pred_fallthru
        _
    $region6: #{parallel_res_mlps_forward.5} parent=1 // loop_footer
      %s18 = sadd.s32 1, %s14
    $region7: #{parallel_res_mlps_forward.5} parent=1 // loop_footer_branch
      %13 = sbr.rel target = $region3
    $region8: #{parallel_res_mlps_forward.5} parent=1 // loop_exit
      _
    %747 = vsyncpa [#allocation3], 1
    %s748 = scalar_lea.sflag [#allocation3], 1
    %749 = vsyncpa %s748, 1

// kernel: parallel_res_mlps_forward.7
$region0: #{parallel_res_mlps_forward.7}
  #allocation0 [shape = 'u32[]', space=smem, size = 0x4, offset = 0x4, fixed_abs, tag = 'smem constant byte address 0x4 - core index']
  #allocation1 [shape = 'u32[144,128]{1,0:T(1,128)}', space=vmem, size = 0x12000, scoped, tag = 'internal scratch']
  %s0 = inlined_call_operand.vmem [shape: f32[4,8,32], index: 0, kind: input, shape index: {}]
  %s1 = inlined_call_operand.vmem [shape: f32[4,32,16], index: 1, kind: input, shape index: {}]
  %s2 = inlined_call_operand.vmem [shape: f32[4,1,16], index: 2, kind: input, shape index: {}]
  %s3 = inlined_call_operand.hbm [shape: f32[4,8,16], index: 3, kind: output, shape index: {}]
  %s4 = sld [smem:[#allocation0]]
  $region45: #{parallel_res_mlps_forward.7} parent=0
    _
  %s6 = ssub.s32 1, %s4
  %s7 = scalar_select 0, %s6, %s4
  $region1: #{parallel_res_mlps_forward.7} parent=0
    #allocation2 [shape = 'u8[16384]{0}', space=vmem, size = 0x4000, scoped, tag = 'output window, operand 0']
    #allocation3 [shape = 's32[2]{0}', space=sflag, size = 0x8, scoped, tag = 'scoped memory for parallel_res_mlps_forward.7']
    %8 = vsyncpa [#allocation3], 0
    %s9 = scalar_lea.sflag [#allocation3], 1
    %10 = vsyncpa %s9, 0
    loop: start=0, step=1, limit=4
    $region2: #{parallel_res_mlps_forward.7} parent=1 // loop_pre_header
      _
    $region3: #{parallel_res_mlps_forward.7} parent=1 // loop_header
      %s12 = sphi 0, %s16
      %p13 = scmp.ge.s32.totalorder %s12, 4
      %s19 = sphi 0, %s45
      %s20 = sphi 0, %s41
      %s21 = sphi 0, %s37
      %s22 = sphi 0, %s33
      %s23 = sphi 0, %s19
      %s24 = sphi 0, %s20
      %s25 = sphi 0, %s21
      %s26 = sphi 0, %s22
      %s27 = sphi 0, %s23
      %s28 = sphi 0, %s24
      %s29 = sphi 0, %s25
      %s30 = sphi 0, %s26
      %s52 = sphi 0, %s54
      %s55 = sphi 0, %s52
      %s56 = sphi 0, %s55
      %s72 = sphi 0, %s56
      %s82 = sphi 0, %s84
      %s85 = sphi 0, %s82
      %s86 = sphi 0, %s85
      %s102 = sphi 0, %s86
      %s110 = sphi 0, %s112
      %s113 = sphi 0, %s110
      %s114 = sphi 0, %s113
      %s130 = sphi 0, %s114
      %s140 = sphi 0, %s142
      %s143 = sphi 0, %s140
      %s144 = sphi 0, %s143
      %s160 = sphi 0, %s144
    $region4: #{parallel_res_mlps_forward.7} parent=1 // loop_header_branch
      %15 = sbr.rel (%p13) target = $region8
    $region5: #{parallel_res_mlps_forward.7} parent=1 // loop_body
      %s17 = ssub.s32 %s12, 1
      %s18 = ssub.s32 %s12, 2
      %s31 = sadd.s32 1, %s22
      %p32 = scmp.ge.s32.totalorder %s31, 1
      %s33 = scalar_select %p32, 0, %s31
      %s34 = sadd.s32 1, %s21
      %s35 = scalar_select %p32, %s34, %s21
      %p36 = scmp.ge.s32.totalorder %s35, 1
      %s37 = scalar_select %p36, 0, %s35
      %s38 = sadd.s32 1, %s20
      %s39 = scalar_select %p36, %s38, %s20
      %p40 = scmp.ge.s32.totalorder %s39, 1
      %s41 = scalar_select %p40, 0, %s39
      %s42 = sadd.s32 1, %s19
      %s43 = scalar_select %p40, %s42, %s19
      %p44 = scmp.ge.s32.totalorder %s43, 2
      %s45 = scalar_select %p44, 0, %s43
      %s46 = ssub.s32 %s19, %s45
      %s47 = ssub.s32 %s21, %s37
      %s48 = sor.u32 %s46, %s47
      %s49 = ssub.s32 %s22, %s33
      %s50 = sor.u32 %s48, %s49
      %p51 = scmp.eq.s32.totalorder %s50, 0
      %s53 = sadd.s32 %s52, 1
      %s54 = scalar_select %p51, %s52, %s53
      %p57 = pneg %p51
      %p58 = scmp.eq.s32.totalorder %s12, 1
      %p59 = por %p57, %p58
      %p60 = scmp.ne.s32.totalorder %s52, %s55
      %p61 = scmp.eq.s32.totalorder %s12, 0
      %p62 = por %p60, %p61
      %p63 = scmp.ne.s32.totalorder %s52, %s55
      %p64 = scmp.eq.s32.totalorder %s17, 1
      %p65 = por %p63, %p64
      %p66 = scmp.ne.s32.totalorder %s55, %s56
      %p67 = scmp.eq.s32.totalorder %s17, 0
      %p68 = por %p66, %p67
      %p69 = scmp.ne.s32.totalorder %s55, %s56
      %p70 = scmp.eq.s32.totalorder %s18, 1
      %p71 = por %p69, %p70
      %p73 = scmp.ne.s32.totalorder %s56, %s72
      %p74 = scmp.eq.s32.totalorder %s18, 0
      %p75 = por %p73, %p74
      %s76 = ssub.s32 %s19, %s45
      %s77 = ssub.s32 %s22, %s33
      %s78 = sor.u32 %s76, %s77
      %s79 = ssub.s32 %s20, %s41
      %s80 = sor.u32 %s78, %s79
      %p81 = scmp.eq.s32.totalorder %s80, 0
      %s83 = sadd.s32 %s82, 1
      %s84 = scalar_select %p81, %s82, %s83
      %p87 = pneg %p81
      %p88 = scmp.eq.s32.totalorder %s12, 1
      %p89 = por %p87, %p88
      %p90 = scmp.ne.s32.totalorder %s82, %s85
      %p91 = scmp.eq.s32.totalorder %s12, 0
      %p92 = por %p90, %p91
      %p93 = scmp.ne.s32.totalorder %s82, %s85
      %p94 = scmp.eq.s32.totalorder %s17, 1
      %p95 = por %p93, %p94
      %p96 = scmp.ne.s32.totalorder %s85, %s86
      %p97 = scmp.eq.s32.totalorder %s17, 0
      %p98 = por %p96, %p97
      %p99 = scmp.ne.s32.totalorder %s85, %s86
      %p100 = scmp.eq.s32.totalorder %s18, 1
      %p101 = por %p99, %p100
      %p103 = scmp.ne.s32.totalorder %s86, %s102
      %p104 = scmp.eq.s32.totalorder %s18, 0
      %p105 = por %p103, %p104
      %s106 = ssub.s32 %s19, %s45
      %s107 = ssub.s32 %s20, %s41
      %s108 = sor.u32 %s106, %s107
      %p109 = scmp.eq.s32.totalorder %s108, 0
      %s111 = sadd.s32 %s110, 1
      %s112 = scalar_select %p109, %s110, %s111
      %p115 = pneg %p109
      %p116 = scmp.eq.s32.totalorder %s12, 1
      %p117 = por %p115, %p116
      %p118 = scmp.ne.s32.totalorder %s110, %s113
      %p119 = scmp.eq.s32.totalorder %s12, 0
      %p120 = por %p118, %p119
      %p121 = scmp.ne.s32.totalorder %s110, %s113
      %p122 = scmp.eq.s32.totalorder %s17, 1
      %p123 = por %p121, %p122
      %p124 = scmp.ne.s32.totalorder %s113, %s114
      %p125 = scmp.eq.s32.totalorder %s17, 0
      %p126 = por %p124, %p125
      %p127 = scmp.ne.s32.totalorder %s113, %s114
      %p128 = scmp.eq.s32.totalorder %s18, 1
      %p129 = por %p127, %p128
      %p131 = scmp.ne.s32.totalorder %s114, %s130
      %p132 = scmp.eq.s32.totalorder %s18, 0
      %p133 = por %p131, %p132
      %s134 = ssub.s32 %s19, %s45
      %s135 = ssub.s32 %s21, %s37
      %s136 = sor.u32 %s134, %s135
      %s137 = ssub.s32 %s20, %s41
      %s138 = sor.u32 %s136, %s137
      %p139 = scmp.eq.s32.totalorder %s138, 0
      %s141 = sadd.s32 %s140, 1
      %s142 = scalar_select %p139, %s140, %s141
      %p145 = pneg %p139
      %p146 = scmp.eq.s32.totalorder %s12, 1
      %p147 = por %p145, %p146
      %p148 = scmp.ne.s32.totalorder %s140, %s143
      %p149 = scmp.eq.s32.totalorder %s12, 0
      %p150 = por %p148, %p149
      %p151 = scmp.ne.s32.totalorder %s140, %s143
      %p152 = scmp.eq.s32.totalorder %s17, 1
      %p153 = por %p151, %p152
      %p154 = scmp.ne.s32.totalorder %s143, %s144
      %p155 = scmp.eq.s32.totalorder %s17, 0
      %p156 = por %p154, %p155
      %p157 = scmp.ne.s32.totalorder %s143, %s144
      %p158 = scmp.eq.s32.totalorder %s18, 1
      %p159 = por %p157, %p158
      %p161 = scmp.ne.s32.totalorder %s144, %s160
      %p162 = scmp.eq.s32.totalorder %s18, 0
      %p163 = por %p161, %p162
      %p164 = scmp.le.s32.totalorder 1, %s12
      %p165 = scmp.lt.s32.totalorder %s12, 3
      %p166 = pnand %p164, %p165
      %p167 = pneg %p166
      // Predicated region
      $region9: #{parallel_res_mlps_forward.7} parent=5 // pred_check
        _
      $region10: #{parallel_res_mlps_forward.7} parent=5 // pred_check_branch
        %169 = sbr.rel (%p166) target = $region12
      $region11: #{parallel_res_mlps_forward.7} parent=5 // pred_region
        %s170 = ssub.s32 %s12, 1
      $region12: #{parallel_res_mlps_forward.7} parent=5 // pred_fallthru
        _
      %p171 = scmp.lt.s32.totalorder %s12, 2
      // Predicated region
      $region13: #{parallel_res_mlps_forward.7} parent=5 // pred_check
        %p172 = pneg %p171
      $region14: #{parallel_res_mlps_forward.7} parent=5 // pred_check_branch
        %174 = sbr.rel (%p172) target = $region16
      $region15: #{parallel_res_mlps_forward.7} parent=5 // pred_region
        // Predicated region
        $region17: #{parallel_res_mlps_forward.7} parent=15 // pred_check
          %p175 = pneg %p62
        $region18: #{parallel_res_mlps_forward.7} parent=15 // pred_check_branch
          %177 = sbr.rel (%p175) target = $region20
        $region19: #{parallel_res_mlps_forward.7} parent=15 // pred_region
          %s178 = smul.u32 2, %s19
          %p179 = scmp.lt.s32.totalorder %s178, 3
          %s180 = scalar_select %p179, %s178, 3
          %p181 = scmp.lt.s32.totalorder %s21, 0
          %s182 = scalar_select %p181, %s21, 0
          %p183 = scmp.lt.s32.totalorder %s22, 0
          %s184 = scalar_select %p183, %s22, 0
          %s185 = sadd.s32 %s184, %s182
          %s186 = sadd.s32 %s185, %s180
          %s187 = smul.addr %s186, 8
          %s188 = scalar_lea.vmem %s0, %s187
          %s189 = smul.u32 2, %s19
        $region20: #{parallel_res_mlps_forward.7} parent=15 // pred_fallthru
          _
        // Predicated region
        $region21: #{parallel_res_mlps_forward.7} parent=15 // pred_check
          %p190 = pneg %p92
        $region22: #{parallel_res_mlps_forward.7} parent=15 // pred_check_branch
          %192 = sbr.rel (%p190) target = $region24
        $region23: #{parallel_res_mlps_forward.7} parent=15 // pred_region
          %s193 = smul.u32 2, %s19
          %s194 = smul.u32 4, %s22
          %p195 = scmp.lt.s32.totalorder %s193, 3
          %s196 = scalar_select %p195, %s193, 3
          %p197 = scmp.lt.s32.totalorder %s194, 3
          %s198 = scalar_select %p197, %s194, 3
          %p199 = scmp.lt.s32.totalorder %s20, 0
          %s200 = scalar_select %p199, %s20, 0
          %s201 = sadd.s32 %s200, %s198
          %s202 = smul.addr %s196, 4
          %s203 = sadd.s32 %s201, %s202
          %s204 = smul.addr %s203, 8
          %s205 = scalar_lea.vmem %s1, %s204
          %s206 = smul.u32 2, %s19
          %s207 = smul.u32 4, %s22
        $region24: #{parallel_res_mlps_forward.7} parent=15 // pred_fallthru
          _
        // Predicated region
        $region25: #{parallel_res_mlps_forward.7} parent=15 // pred_check
          %p208 = pneg %p120
        $region26: #{parallel_res_mlps_forward.7} parent=15 // pred_check_branch
          %210 = sbr.rel (%p208) target = $region28
        $region27: #{parallel_res_mlps_forward.7} parent=15 // pred_region
          %s211 = smul.u32 2, %s19
          %p212 = scmp.lt.s32.totalorder %s211, 3
          %s213 = scalar_select %p212, %s211, 3
          %p214 = scmp.lt.s32.totalorder %s20, 0
          %s215 = scalar_select %p214, %s20, 0
          %s216 = sadd.s32 %s215, %s213
          %s217 = scalar_lea.vmem %s2, %s216
          %s218 = smul.u32 2, %s19
        $region28: #{parallel_res_mlps_forward.7} parent=15 // pred_fallthru
          _
      $region16: #{parallel_res_mlps_forward.7} parent=5 // pred_fallthru
        _
      %p219 = scmp.le.s32.totalorder 1, %s12
      %p220 = scmp.lt.s32.totalorder %s12, 3
      %p221 = pnand %p219, %p220
      %p222 = pneg %p221
      // Predicated region
      $region29: #{parallel_res_mlps_forward.7} parent=5 // pred_check
        _
      $region30: #{parallel_res_mlps_forward.7} parent=5 // pred_check_branch
        %224 = sbr.rel (%p221) target = $region32
      $region31: #{parallel_res_mlps_forward.7} parent=5 // pred_region
        %s225 = ssub.s32 %s12, 1
        %s226 = smul.u32 2, %s23
        %p227 = scmp.lt.s32.totalorder %s226, 3
        %s228 = scalar_select %p227, %s226, 3
        %p229 = scmp.lt.s32.totalorder %s25, 0
        %s230 = scalar_select %p229, %s25, 0
        %p231 = scmp.lt.s32.totalorder %s26, 0
        %s232 = scalar_select %p231, %s26, 0
        %s233 = sadd.s32 %s232, %s230
        %s234 = sadd.s32 %s233, %s228
        %s235 = smul.addr %s234, 8
        %s236 = scalar_lea.vmem %s0, %s235
        %p237 = pneg %p68
        %p238 = pneg %p65
        %s239 = smul.u32 2, %s23
        %s240 = smul.u32 4, %s26
        %p241 = scmp.lt.s32.totalorder %s239, 3
        %s242 = scalar_select %p241, %s239, 3
        %p243 = scmp.lt.s32.totalorder %s240, 3
        %s244 = scalar_select %p243, %s240, 3
        %p245 = scmp.lt.s32.totalorder %s24, 0
        %s246 = scalar_select %p245, %s24, 0
        %s247 = sadd.s32 %s246, %s244
        %s248 = smul.addr %s242, 4
        %s249 = sadd.s32 %s247, %s248
        %s250 = smul.addr %s249, 8
        %s251 = scalar_lea.vmem %s1, %s250
        %p252 = pneg %p98
        %p253 = pneg %p95
        %s254 = smul.u32 2, %s23
        %p255 = scmp.lt.s32.totalorder %s254, 3
        %s256 = scalar_select %p255, %s254, 3
        %p257 = scmp.lt.s32.totalorder %s24, 0
        %s258 = scalar_select %p257, %s24, 0
        %s259 = sadd.s32 %s258, %s256
        %s260 = scalar_lea.vmem %s2, %s259
        %p261 = pneg %p126
        %p262 = pneg %p123
        %p263 = pneg %p156
        %p264 = pneg %p153
        %s265 = sand.u32 %s143, 1
        %s266 = scalar_lea.sflag [#allocation3], %s265
        %s267 = sand.u32 %s143, 1
        %s268 = smul.addr %s267, 16
        %s269 = scalar_lea.vmem [#allocation2], %s268
        %s270 = smul.u32 2, %s23
        %p271 = scmp.lt.s32.totalorder %s270, 3
        %s272 = scalar_select %p271, %s270, 3
        %p273 = scmp.lt.s32.totalorder %s25, 0
        %s274 = scalar_select %p273, %s25, 0
        %p275 = scmp.lt.s32.totalorder %s26, 0
        %s276 = scalar_select %p275, %s26, 0
        %s277 = sadd.s32 %s276, %s274
        %s278 = sadd.s32 %s277, %s272
        %s279 = smul.addr %s278, 8
        %s280 = scalar_lea.vmem %s0, %s279
        %s281 = smul.u32 2, %s23
        %s282 = smul.u32 2, %s23
        %s283 = smul.u32 4, %s26
        %p284 = scmp.lt.s32.totalorder %s282, 3
        %s285 = scalar_select %p284, %s282, 3
        %p286 = scmp.lt.s32.totalorder %s283, 3
        %s287 = scalar_select %p286, %s283, 3
        %p288 = scmp.lt.s32.totalorder %s24, 0
        %s289 = scalar_select %p288, %s24, 0
        %s290 = sadd.s32 %s289, %s287
        %s291 = smul.addr %s285, 4
        %s292 = sadd.s32 %s290, %s291
        %s293 = smul.addr %s292, 8
        %s294 = scalar_lea.vmem %s1, %s293
        %s295 = smul.u32 2, %s23
        %s296 = smul.u32 4, %s26
        %s297 = smul.u32 2, %s23
        %p298 = scmp.lt.s32.totalorder %s297, 3
        %s299 = scalar_select %p298, %s297, 3
        %p300 = scmp.lt.s32.totalorder %s24, 0
        %s301 = scalar_select %p300, %s24, 0
        %s302 = sadd.s32 %s301, %s299
        %s303 = scalar_lea.vmem %s2, %s302
        %s304 = smul.u32 2, %s23
        %s305 = smul.u32 2, %s23
        %v306 = vld [vmem:[%s280] sm:$0xff]
        %v307 = vld [vmem:[%s280 + $0x8] sm:$0xff]
        %v308 = vld [vmem:[%s294] sm:$0xff]
        %v309 = vld [vmem:[%s294 + $0x8] sm:$0xff]
        %v310 = vld [vmem:[%s294 + $0x10] sm:$0xff]
        %v311 = vld [vmem:[%s294 + $0x18] sm:$0xff]
        %v312 = vld [vmem:[%s294 + $0x20] sm:$0xff]
        %v313 = vld [vmem:[%s294 + $0x28] sm:$0xff]
        %v314 = vld [vmem:[%s294 + $0x30] sm:$0xff]
        %v315 = vld [vmem:[%s294 + $0x38] sm:$0xff]
        %v316 = vld [vmem:[%s303] sm:$0x1]
        %v317 = vld [vmem:[%s303 + $0x1] sm:$0x1]
        %v320 = vlaneseq
        %v321 = vshrl.u32 %v320, 7
        %v322 = vsub.s32 0, %v321
        %v323 = vrot.slane %v316, %v322
        %v324 = vlaneseq
        %v325 = vshrl.u32 %v324, 7
        %v326 = vsub.s32 0, %v325
        %v327 = vrot.slane %v317, %v326
        %vm330 = vcmask 261120
        %v332 = vsel %vm330, %v306, 0
        %334 = vmatprep.subr.mxu0 0.0
        %335 = vmatpush1.msra.mxu0 %v308
        %336 = vmatprep.subr.mxu0 0.0
        %337 = vmatpush1.msra.mxu0 %v309
        %338 = vmatprep.subr.mxu0 0.0
        %339 = vmatpush1.msra.mxu0 %v310
        %340 = vmatprep.subr.mxu0 0.0
        %341 = vmatpush1.msra.mxu0 %v311
        %342 = vmatprep.subr.mxu0 0.0
        %343 = vmatpush1.msra.mxu0 0.0
        %344 = vmatprep.subr.mxu0 0.0
        %345 = vmatpush1.msra.mxu0 0.0
        %346 = vmatprep.subr.mxu0 0.0
        %347 = vmatpush1.msra.mxu0 0.0
        %348 = vmatprep.subr.mxu0 0.0
        %349 = vmatpush1.msra.mxu0 0.0
        %350 = vmatprep.subr.mxu0 0.0
        %351 = vmatpush1.msra.mxu0 0.0
        %352 = vmatprep.subr.mxu0 0.0
        %353 = vmatpush1.msra.mxu0 0.0
        %354 = vmatprep.subr.mxu0 0.0
        %355 = vmatpush1.msra.mxu0 0.0
        %356 = vmatprep.subr.mxu0 0.0
        %357 = vmatpush1.msra.mxu0 0.0
        %358 = vmatprep.subr.mxu0 0.0
        %359 = vmatpush1.msra.mxu0 0.0
        %360 = vmatprep.subr.mxu0 0.0
        %361 = vmatpush1.msra.mxu0 0.0
        %362 = vmatprep.subr.mxu0 0.0
        %363 = vmatpush1.msra.mxu0 0.0
        %364 = vmatprep.subr.mxu0 0.0
        %365 = vmatpush1.msra.mxu0 0.0
        %366 = vmatprep.subr.mxu0 0.0
        %367 = vmatpush1.msra.mxu0 0.0
        %368 = vmatprep.subr.mxu0 0.0
        %369 = vmatpush1.msra.mxu0 0.0
        %370 = vmatprep.subr.mxu0 0.0
        %371 = vmatpush1.msra.mxu0 0.0
        %372 = vmatprep.subr.mxu0 0.0
        %373 = vmatpush1.msra.mxu0 0.0
        %374 = vmatprep.subr.mxu0 0.0
        %375 = vmatpush1.msra.mxu0 0.0
        %376 = vmatprep.subr.mxu0 0.0
        %377 = vmatpush1.msra.mxu0 0.0
        %378 = vmatprep.subr.mxu0 0.0
        %379 = vmatpush1.msra.mxu0 0.0
        %380 = vmatprep.subr.mxu0 0.0
        %381 = vmatpush1.msra.mxu0 0.0
        %382 = vmatprep.subr.mxu0 0.0
        %383 = vmatpush1.msra.mxu0 0.0
        %384 = vmatprep.subr.mxu0 0.0
        %385 = vmatpush1.msra.mxu0 0.0
        %386 = vmatprep.subr.mxu0 0.0
        %387 = vmatpush1.msra.mxu0 0.0
        %388 = vmatprep.subr.mxu0 0.0
        %389 = vmatpush1.msra.mxu0 0.0
        %390 = vmatprep.subr.mxu0 0.0
        %391 = vmatpush1.msra.mxu0 0.0
        %392 = vmatprep.subr.mxu0 0.0
        %393 = vmatpush1.msra.mxu0 0.0
        %394 = vmatprep.subr.mxu0 0.0
        %395 = vmatpush1.msra.mxu0 0.0
        %396 = vmatprep.subr.mxu0 0.0
        %397 = vmatpush1.msra.mxu0 0.0
        %398 = vmatprep.mubr.f32.mxu0 0.0
        %399 = vmatmul.mubr.f32.gmra.mrb[0].mxu0 %v332
        %v400 = vpop.f32.mrb[0].mxu0
        %v401 = vadd.f32 %v323, %v400
        %v402 = vpop.f32.mrb[0].mxu0
        %403 = vdwg.mxu0
        %v405 = vsel %vm330, %v307, 0
        %407 = vmatprep.subr.mxu0 0.0
        %408 = vmatpush1.msra.mxu0 %v312
        %409 = vmatprep.subr.mxu0 0.0
        %410 = vmatpush1.msra.mxu0 %v313
        %411 = vmatprep.subr.mxu0 0.0
        %412 = vmatpush1.msra.mxu0 %v314
        %413 = vmatprep.subr.mxu0 0.0
        %414 = vmatpush1.msra.mxu0 %v315
        %415 = vmatprep.subr.mxu0 0.0
        %416 = vmatpush1.msra.mxu0 0.0
        %417 = vmatprep.subr.mxu0 0.0
        %418 = vmatpush1.msra.mxu0 0.0
        %419 = vmatprep.subr.mxu0 0.0
        %420 = vmatpush1.msra.mxu0 0.0
        %421 = vmatprep.subr.mxu0 0.0
        %422 = vmatpush1.msra.mxu0 0.0
        %423 = vmatprep.subr.mxu0 0.0
        %424 = vmatpush1.msra.mxu0 0.0
        %425 = vmatprep.subr.mxu0 0.0
        %426 = vmatpush1.msra.mxu0 0.0
        %427 = vmatprep.subr.mxu0 0.0
        %428 = vmatpush1.msra.mxu0 0.0
        %429 = vmatprep.subr.mxu0 0.0
        %430 = vmatpush1.msra.mxu0 0.0
        %431 = vmatprep.subr.mxu0 0.0
        %432 = vmatpush1.msra.mxu0 0.0
        %433 = vmatprep.subr.mxu0 0.0
        %434 = vmatpush1.msra.mxu0 0.0
        %435 = vmatprep.subr.mxu0 0.0
        %436 = vmatpush1.msra.mxu0 0.0
        %437 = vmatprep.subr.mxu0 0.0
        %438 = vmatpush1.msra.mxu0 0.0
        %439 = vmatprep.subr.mxu0 0.0
        %440 = vmatpush1.msra.mxu0 0.0
        %441 = vmatprep.subr.mxu0 0.0
        %442 = vmatpush1.msra.mxu0 0.0
        %443 = vmatprep.subr.mxu0 0.0
        %444 = vmatpush1.msra.mxu0 0.0
        %445 = vmatprep.subr.mxu0 0.0
        %446 = vmatpush1.msra.mxu0 0.0
        %447 = vmatprep.subr.mxu0 0.0
        %448 = vmatpush1.msra.mxu0 0.0
        %449 = vmatprep.subr.mxu0 0.0
        %450 = vmatpush1.msra.mxu0 0.0
        %451 = vmatprep.subr.mxu0 0.0
        %452 = vmatpush1.msra.mxu0 0.0
        %453 = vmatprep.subr.mxu0 0.0
        %454 = vmatpush1.msra.mxu0 0.0
        %455 = vmatprep.subr.mxu0 0.0
        %456 = vmatpush1.msra.mxu0 0.0
        %457 = vmatprep.subr.mxu0 0.0
        %458 = vmatpush1.msra.mxu0 0.0
        %459 = vmatprep.subr.mxu0 0.0
        %460 = vmatpush1.msra.mxu0 0.0
        %461 = vmatprep.subr.mxu0 0.0
        %462 = vmatpush1.msra.mxu0 0.0
        %463 = vmatprep.subr.mxu0 0.0
        %464 = vmatpush1.msra.mxu0 0.0
        %465 = vmatprep.subr.mxu0 0.0
        %466 = vmatpush1.msra.mxu0 0.0
        %467 = vmatprep.subr.mxu0 0.0
        %468 = vmatpush1.msra.mxu0 0.0
        %469 = vmatprep.subr.mxu0 0.0
        %470 = vmatpush1.msra.mxu0 0.0
        %471 = vmatprep.mubr.f32.mxu0 0.0
        %472 = vmatmul.mubr.f32.gmra.mrb[0].mxu0 %v405
        %v473 = vpop.f32.mrb[0].mxu0
        %v474 = vadd.f32 %v327, %v473
        %v475 = vpop.f32.mrb[0].mxu0
        %476 = vdwg.mxu0
        %vm477 = vcmask 130048
        %478 = vst.msk [vmem:[%s269] sm:$0xff] %vm477, %v401
        %479 = vst.msk [vmem:[%s269 + $0x8] sm:$0xff] %vm477, %v474
        %s480 = sand.u32 %s143, 1
        %s481 = scalar_lea.sflag [#allocation3], %s480
        %s482 = sand.u32 %s143, 1
        %s483 = smul.addr %s482, 16
        %s484 = scalar_lea.vmem [#allocation2], %s483
        // Predicated region
        $region33: #{parallel_res_mlps_forward.7} parent=31 // pred_check
          %p485 = pneg %p153
        $region34: #{parallel_res_mlps_forward.7} parent=31 // pred_check_branch
          %487 = sbr.rel (%p485) target = $region36
        $region35: #{parallel_res_mlps_forward.7} parent=31 // pred_region
          %s488 = smul.u32 2, %s23
          %s490 = ssub.s32 256, 256
          %491 = vsyncadd %s481, %s490
          %s492 = sadd.s32 %s24, %s25
          %s493 = sadd.s32 %s492, %s488
          %s494 = smul.addr %s493, 128
          %s495 = scalar_lea.hbm %s3, %s494
          %s496 = sshll.u32 %s484, 4
          %s497 = int_to_ptr.vmem [resolvable:$true] %s496
          %502 = dma.vmem_to_hbm [thread:$0]  %s497, 256, %s495, %s481, 128, 128, 8
        $region36: #{parallel_res_mlps_forward.7} parent=31 // pred_fallthru
          _
      $region32: #{parallel_res_mlps_forward.7} parent=5 // pred_fallthru
        _
      %p503 = scmp.le.s32.totalorder 2, %s12
      // Predicated region
      $region37: #{parallel_res_mlps_forward.7} parent=5 // pred_check
        %p504 = pneg %p503
      $region38: #{parallel_res_mlps_forward.7} parent=5 // pred_check_branch
        %506 = sbr.rel (%p504) target = $region40
      $region39: #{parallel_res_mlps_forward.7} parent=5 // pred_region
        %s507 = ssub.s32 %s12, 2
        // Predicated region
        $region41: #{parallel_res_mlps_forward.7} parent=39 // pred_check
          %p508 = pneg %p159
        $region42: #{parallel_res_mlps_forward.7} parent=39 // pred_check_branch
          %510 = sbr.rel (%p508) target = $region44
        $region43: #{parallel_res_mlps_forward.7} parent=39 // pred_region
          %s511 = sand.u32 %s144, 1
          %s512 = scalar_lea.sflag [#allocation3], %s511
          %s513 = sand.u32 %s144, 1
          %s514 = smul.addr %s513, 16
          %s515 = scalar_lea.vmem [#allocation2], %s514
          %516 = dma.done %s512, 256
        $region44: #{parallel_res_mlps_forward.7} parent=39 // pred_fallthru
          _
      $region40: #{parallel_res_mlps_forward.7} parent=5 // pred_fallthru
        _
    $region6: #{parallel_res_mlps_forward.7} parent=1 // loop_footer
      %s16 = sadd.s32 1, %s12
    $region7: #{parallel_res_mlps_forward.7} parent=1 // loop_footer_branch
      %11 = sbr.rel target = $region3
    $region8: #{parallel_res_mlps_forward.7} parent=1 // loop_exit
      _
    %517 = vsyncpa [#allocation3], 1
    %s518 = scalar_lea.sflag [#allocation3], 1
    %519 = vsyncpa %s518, 1

</llo_original>
